<compile_context>
chip_gen: v7x
topology: tpu7x:2x2x1
jax: 0.10.0
libtpu: 0.0.40
codegen_flags: <defaults>
</compile_context>

<pallas_src>
import functools

import jax
import jax.numpy as jnp
from jax import lax
from jax.experimental import pallas as pl
from jax.experimental.pallas import tpu as pltpu


# Fits comfortably under v7x's 64 MiB physical VMEM while raising v5e's 16 MiB
# default scoped limit.
_VMEM_LIMIT_BYTES = 48 * 1024 * 1024


def _round_up(x, m):
    return (x + m - 1) // m * m


def _pick_tile_n(n, s):
    """Point-tile size: as large as reasonable, shrunk for big S so the
    (tile, S) f32 temporaries (distances / weights / masks) stay small."""
    tile = min(512, _round_up(n, 8))
    while tile > 64 and tile * s * 4 * 4 > (8 << 20):
        tile //= 2
    return _round_up(max(tile, 8), 8)


# ---------------------------------------------------------------------------
# Fused kernel: 3-NN interpolation + concat-folded Token_Embed + PosExtraction.
# Grid = (B, N/tile_n).  xyz2 / points2 blocks are constant along the N axis so
# they stay VMEM-resident while xyz1 / points1 / output tiles stream through.
# ---------------------------------------------------------------------------
def _fp_kernel(*refs, has_p1):
    if has_p1:
        (xyz1_ref, xyz2_ref, pts2_ref, pts1_ref, w1a,
         w1b, b1, w2, b2, w3, b3, w4, b4, w5, b5, w6, b6, o_ref) = refs
    else:
        (xyz1_ref, xyz2_ref, pts2_ref,
         w1b, b1, w2, b2, w3, b3, w4, b4, w5, b5, w6, b6, o_ref) = refs
        pts1_ref = w1a = None

    f32, bf16 = jnp.float32, jnp.bfloat16
    x1 = xyz1_ref[0]                       # (TN, 3)  f32
    x2 = xyz2_ref[0]                       # (S, 3)   f32
    p2 = pts2_ref[0]                       # (S, D2)  f32
    tn = x1.shape[0]
    s = x2.shape[0]

    if s == 1:
        # Reference S==1 branch: points2.repeat(1, N, 1) — exact broadcast.
        interp = jnp.broadcast_to(p2, (tn, p2.shape[-1])).astype(f32)
    else:
        # misc.square_distance: -2 * x1 @ x2^T + |x1|^2 + |x2|^2
        d = -2.0 * lax.dot_general(x1, x2, (((1,), (1,)), ((), ())),
                                   preferred_element_type=f32)
        d = d + jnp.sum(x1 * x1, axis=-1, keepdims=True)
        d = d + jnp.sum(x2 * x2, axis=-1)[None, :]

        # Top-3 nearest neighbours via masked-min passes (== sort()[:, :3]).
        # One lane reduction per pass.  Exact-distance ties (measure-zero for
        # float data) may select more than one column in a pass; the final
        # row-sum normalization keeps the result consistent in that case.
        big = jnp.float32(1e30)
        w_sparse = jnp.zeros_like(d)
        for _ in range(min(3, s)):
            min_d = jnp.min(d, axis=-1, keepdims=True)          # (TN, 1)
            one_hot = d == min_d
            w_k = pl.reciprocal(min_d + 1e-8, approx=True)      # EUP, ~free
            w_sparse = w_sparse + jnp.where(one_hot, w_k, 0.0)
            d = jnp.where(one_hot, big, d)
        norm = jnp.sum(w_sparse, axis=-1, keepdims=True)
        w_sparse = w_sparse * pl.reciprocal(norm, approx=True)
        # Weighted gather of points2 expressed as a (TN,S) x (S,D2) matmul.
        interp = jnp.dot(w_sparse, p2, preferred_element_type=f32)

    # first_conv conv1: concat([points1, interp]) @ W1 folded into two matmuls.
    pre1 = jnp.dot(interp.astype(bf16), w1b[...], preferred_element_type=f32)
    if has_p1:
        pre1 = pre1 + jnp.dot(pts1_ref[0].astype(bf16), w1a[...],
                              preferred_element_type=f32)
    h = jnp.maximum(pre1 + b1[...], 0.0)
    # first_conv conv2
    h = jnp.dot(h.astype(bf16), w2[...], preferred_element_type=f32) + b2[...]
    # per-point group of size 1: cat([global, local]) == cat([h, h]); W3 is
    # pre-folded in the wrapper so we feed h straight into the widest matmul.
    g = jnp.maximum(jnp.dot(h.astype(bf16), w3[...],
                            preferred_element_type=f32) + b3[...], 0.0)
    tok = jnp.dot(g.astype(bf16), w4[...], preferred_element_type=f32) + b4[...]
    # PosExtraction: one ConvBNReLURes1D block (blocks=1, res_expansion=1.0)
    r = jnp.maximum(jnp.dot(tok.astype(bf16), w5[...],
                            preferred_element_type=f32) + b5[...], 0.0)
    r = jnp.maximum(jnp.dot(r.astype(bf16), w6[...],
                            preferred_element_type=f32) + b6[...], 0.0)
    o_ref[0] = jnp.maximum(r + tok, 0.0).astype(o_ref.dtype)


# ---------------------------------------------------------------------------
# Parameter construction (deterministic, synthetic) with inference-mode BN
# folding, followed by kernel-side preparation: W3 concat fold, W1 split
# across the (points1 ++ interpolated) concat, lane-dense (x128) channel
# padding, bf16 weights / f32 biases.
# ---------------------------------------------------------------------------
def _bn_fold(w, b, gamma, beta, mean, var, eps=1e-5):
    scale = gamma / jnp.sqrt(var + eps)
    return w * scale[None, :], b * scale + beta - mean * scale


def init_params(key, in_channel, out_channel, res_expansion=1.0):
    if in_channel == 3:
        c1a, c1b, c2a = 128, 256, 512
    else:
        c1a, c1b, c2a = in_channel, in_channel, out_channel
    mid = int(out_channel * res_expansion)
    dims = [
        (in_channel, c1a, True),     # first_conv: conv1 + BN + ReLU
        (c1a, c1b, False),           # first_conv: conv2
        (2 * c1b, c2a, True),        # second_conv: conv1 (consumes cat) + BN + ReLU
        (c2a, out_channel, False),   # second_conv: conv2
        (out_channel, mid, True),    # extraction net1 (conv + BN + ReLU)
        (mid, out_channel, True),    # extraction net2 (conv + BN + ReLU)
    ]
    raw = []
    for cin, cout, has_bn in dims:
        key, k1, k2, k3, k4, k5, k6 = jax.random.split(key, 7)
        w = jax.random.normal(k1, (cin, cout), jnp.float32) * 0.1
        b = jax.random.normal(k2, (cout,), jnp.float32) * 0.1
        if has_bn:
            gamma = jax.random.uniform(k3, (cout,), jnp.float32, 0.5, 1.5)
            beta = jax.random.normal(k4, (cout,), jnp.float32) * 0.1
            mean = jax.random.normal(k5, (cout,), jnp.float32) * 0.1
            var = jax.random.uniform(k6, (cout,), jnp.float32, 0.5, 1.5)
            w, b = _bn_fold(w, b, gamma, beta, mean, var)
        raw.append((w, b))
    return raw


def prepare_params(raw_params, d1):
    """d1 = channel count of points1 (0 if points1 is None)."""
    (w1, b1), (w2, b2), (w3, b3), (w4, b4), (w5, b5), (w6, b6) = raw_params

    # Group-size-1 reading: cat([global, local]) == cat([h, h]), so
    # [h, h] @ W3 == h @ (W3_top + W3_bot).  Exact algebraic fold.
    c1b = w3.shape[0] // 2
    w3 = w3[:c1b] + w3[c1b:]

    # Split first conv across the (points1 ++ interpolated) concat so the
    # concat never materializes: x @ W1 == p1 @ W1a + interp @ W1b.
    w1a, w1b = (w1[:d1], w1[d1:]) if d1 > 0 else (None, w1)

    def pad_cols(w, b):
        cout = w.shape[1]
        cp = _round_up(cout, 128)
        return (jnp.pad(w, ((0, 0), (0, cp - cout))),
                jnp.pad(b, (0, cp - cout)))

    layers = []
    prev_out_pad = None
    for idx, (w, b) in enumerate([(w1b, b1), (w2, b2), (w3, b3),
                                  (w4, b4), (w5, b5), (w6, b6)]):
        if idx > 0:  # extra input channels are exactly zero -> zero rows exact
            w = jnp.pad(w, ((0, prev_out_pad - w.shape[0]), (0, 0)))
        w, b = pad_cols(w, b)
        prev_out_pad = w.shape[1]
        layers.append((w.astype(jnp.bfloat16), b[None, :].astype(jnp.float32)))

    if w1a is not None:
        c1a_pad = layers[0][0].shape[1]
        w1a = jnp.pad(w1a, ((0, 0), (0, c1a_pad - w1a.shape[1])))
        w1a = w1a.astype(jnp.bfloat16)
    return w1a, layers


# ---------------------------------------------------------------------------
# Full forward: one fused pallas_call.
# ---------------------------------------------------------------------------
def pointnet_fp_forward(xyz1, xyz2, points1, points2, params, out_channel,
                        *, tile_n=None):
    w1a, layers = params
    B, N, _ = xyz1.shape
    _, S, D2 = points2.shape
    has_p1 = points1 is not None
    cout_pad = layers[-1][0].shape[1]

    if tile_n is None:
        tile_n = _pick_tile_n(N, S)
    n_pad = _round_up(N, tile_n)
    if n_pad != N:
        xyz1 = jnp.pad(xyz1, ((0, 0), (0, n_pad - N), (0, 0)))
        if has_p1:
            points1 = jnp.pad(points1, ((0, 0), (0, n_pad - N), (0, 0)))

    args = [xyz1.astype(jnp.float32), xyz2.astype(jnp.float32),
            points2.astype(jnp.float32)]
    in_specs = [
        pl.BlockSpec((1, tile_n, 3), lambda b, n: (b, n, 0)),
        pl.BlockSpec((1, S, 3), lambda b, n: (b, 0, 0)),
        pl.BlockSpec((1, S, D2), lambda b, n: (b, 0, 0)),
    ]
    if has_p1:
        D1 = points1.shape[-1]
        args += [points1.astype(jnp.float32), w1a]
        in_specs += [pl.BlockSpec((1, tile_n, D1), lambda b, n: (b, n, 0)),
                     pl.BlockSpec(w1a.shape, lambda b, n: (0, 0))]
    for w, bias in layers:
        args += [w, bias]
        in_specs += [pl.BlockSpec(w.shape, lambda b, n: (0, 0)),
                     pl.BlockSpec(bias.shape, lambda b, n: (0, 0))]

    out = pl.pallas_call(
        functools.partial(_fp_kernel, has_p1=has_p1),
        out_shape=jax.ShapeDtypeStruct((B, n_pad, cout_pad), jnp.float32),
        grid=(B, n_pad // tile_n),
        in_specs=in_specs,
        out_specs=pl.BlockSpec((1, tile_n, cout_pad), lambda b, n: (b, n, 0)),
        compiler_params=pltpu.CompilerParams(
            dimension_semantics=("parallel", "parallel"),
            vmem_limit_bytes=_VMEM_LIMIT_BYTES),
    )(*args)
    return out[:, :N, :out_channel]        # channels-last (B, N, out_channel)


if __name__ == "__main__":
    key = jax.random.PRNGKey(0)
    B, N, S = 2, 16, 8
    D1, D2 = 8, 8
    in_channel = D1 + D2          # 16  (points1 ++ interpolated points2)
    out_channel = 32

    k1, k2, k3, k4, k5 = jax.random.split(key, 5)
    xyz1 = jax.random.normal(k1, (B, N, 3), jnp.float32)
    xyz2 = jax.random.normal(k2, (B, S, 3), jnp.float32)
    points1 = jax.random.normal(k3, (B, N, D1), jnp.float32)
    points2 = jax.random.normal(k4, (B, S, D2), jnp.float32)

    raw = init_params(k5, in_channel, out_channel)
    params = prepare_params(raw, D1)

    out = pointnet_fp_forward(xyz1, xyz2, points1, points2, params, out_channel)
    jax.block_until_ready(out)
    assert out.shape == (B, N, out_channel) and out.dtype == jnp.float32
    print("KERNEL_OK")
</pallas_src>

<mosaic_0001>
module attributes {stable_mosaic.version = 11 : i64} {
  func.func @_fp_kernel(%arg0: i32, %arg1: i32, %arg2: memref<1x16x3xf32, #tpu.memory_space<vmem>>, %arg3: memref<1x8x3xf32, #tpu.memory_space<vmem>>, %arg4: memref<1x8x8xf32, #tpu.memory_space<vmem>>, %arg5: memref<1x16x8xf32, #tpu.memory_space<vmem>>, %arg6: memref<8x128xbf16, #tpu.memory_space<vmem>>, %arg7: memref<8x128xbf16, #tpu.memory_space<vmem>>, %arg8: memref<1x128xf32, #tpu.memory_space<vmem>>, %arg9: memref<128x128xbf16, #tpu.memory_space<vmem>>, %arg10: memref<1x128xf32, #tpu.memory_space<vmem>>, %arg11: memref<128x128xbf16, #tpu.memory_space<vmem>>, %arg12: memref<1x128xf32, #tpu.memory_space<vmem>>, %arg13: memref<128x128xbf16, #tpu.memory_space<vmem>>, %arg14: memref<1x128xf32, #tpu.memory_space<vmem>>, %arg15: memref<128x128xbf16, #tpu.memory_space<vmem>>, %arg16: memref<1x128xf32, #tpu.memory_space<vmem>>, %arg17: memref<128x128xbf16, #tpu.memory_space<vmem>>, %arg18: memref<1x128xf32, #tpu.memory_space<vmem>>, %arg19: memref<1x16x128xf32, #tpu.memory_space<vmem>>) attributes {dimension_semantics = [#tpu.dimension_semantics<parallel>, #tpu.dimension_semantics<parallel>], iteration_bounds = array<i64: 2, 1>, scalar_prefetch = 0 : i64, scratch_operands = 0 : i64, tpu.core_type = #tpu.core_type<tc>, window_params = [{transform_indices = @transform_0, window_bounds = array<i64: 1, 16, 3>}, {transform_indices = @transform_1, window_bounds = array<i64: 1, 8, 3>}, {transform_indices = @transform_2, window_bounds = array<i64: 1, 8, 8>}, {transform_indices = @transform_3, window_bounds = array<i64: 1, 16, 8>}, {pipeline_mode = #tpu.pipeline_mode<synchronous>, transform_indices = @transform_4, window_bounds = array<i64: 8, 128>}, {pipeline_mode = #tpu.pipeline_mode<synchronous>, transform_indices = @transform_5, window_bounds = array<i64: 8, 128>}, {pipeline_mode = #tpu.pipeline_mode<synchronous>, transform_indices = @transform_6, window_bounds = array<i64: 1, 128>}, {pipeline_mode = #tpu.pipeline_mode<synchronous>, transform_indices = @transform_7, window_bounds = array<i64: 128, 128>}, {pipeline_mode = #tpu.pipeline_mode<synchronous>, transform_indices = @transform_8, window_bounds = array<i64: 1, 128>}, {pipeline_mode = #tpu.pipeline_mode<synchronous>, transform_indices = @transform_9, window_bounds = array<i64: 128, 128>}, {pipeline_mode = #tpu.pipeline_mode<synchronous>, transform_indices = @transform_10, window_bounds = array<i64: 1, 128>}, {pipeline_mode = #tpu.pipeline_mode<synchronous>, transform_indices = @transform_11, window_bounds = array<i64: 128, 128>}, {pipeline_mode = #tpu.pipeline_mode<synchronous>, transform_indices = @transform_12, window_bounds = array<i64: 1, 128>}, {pipeline_mode = #tpu.pipeline_mode<synchronous>, transform_indices = @transform_13, window_bounds = array<i64: 128, 128>}, {pipeline_mode = #tpu.pipeline_mode<synchronous>, transform_indices = @transform_14, window_bounds = array<i64: 1, 128>}, {pipeline_mode = #tpu.pipeline_mode<synchronous>, transform_indices = @transform_15, window_bounds = array<i64: 128, 128>}, {pipeline_mode = #tpu.pipeline_mode<synchronous>, transform_indices = @transform_16, window_bounds = array<i64: 1, 128>}, {transform_indices = @transform_17, window_bounds = array<i64: 1, 16, 128>}]} {
    %c0 = arith.constant 0 : index
    %c0_0 = arith.constant 0 : index
    %c0_1 = arith.constant 0 : index
    %0 = vector.load %arg2[%c0, %c0_0, %c0_1] : memref<1x16x3xf32, #tpu.memory_space<vmem>>, vector<1x16x3xf32>
    %1 = vector.shape_cast %0 : vector<1x16x3xf32> to vector<16x3xf32>
    %c0_2 = arith.constant 0 : index
    %c0_3 = arith.constant 0 : index
    %c0_4 = arith.constant 0 : index
    %2 = vector.load %arg3[%c0_2, %c0_3, %c0_4] : memref<1x8x3xf32, #tpu.memory_space<vmem>>, vector<1x8x3xf32>
    %3 = vector.shape_cast %2 : vector<1x8x3xf32> to vector<8x3xf32>
    %c0_5 = arith.constant 0 : index
    %c0_6 = arith.constant 0 : index
    %c0_7 = arith.constant 0 : index
    %4 = vector.load %arg4[%c0_5, %c0_6, %c0_7] : memref<1x8x8xf32, #tpu.memory_space<vmem>>, vector<1x8x8xf32>
    %5 = vector.shape_cast %4 : vector<1x8x8xf32> to vector<8x8xf32>
    %cst = arith.constant dense<0.000000e+00> : vector<16x8xf32>
    %6 = tpu.matmul %1, %3, %cst {dimension_numbers = #tpu.dot_dimension_numbers<[1], [1], [0], [0], [0, 0, 1, 0], [], []>} : vector<16x3xf32>, vector<8x3xf32>, vector<16x8xf32> -> vector<16x8xf32>
    %cst_8 = arith.constant -2.000000e+00 : f32
    %7 = vector.broadcast %cst_8 : f32 to vector<16x8xf32>
    %8 = arith.mulf %7, %6 : vector<16x8xf32>
    %9 = arith.mulf %1, %1 : vector<16x3xf32>
    %cst_9 = arith.constant dense<0.000000e+00> : vector<16xf32>
    %10 = vector.multi_reduction <add>, %9, %cst_9 [1] : vector<16x3xf32> to vector<16xf32>
    %11 = vector.shape_cast %10 : vector<16xf32> to vector<16x1xf32>
    %12 = vector.broadcast %11 : vector<16x1xf32> to vector<16x8xf32>
    %13 = arith.addf %8, %12 : vector<16x8xf32>
    %14 = arith.mulf %3, %3 : vector<8x3xf32>
    %cst_10 = arith.constant dense<0.000000e+00> : vector<8xf32>
    %15 = vector.multi_reduction <add>, %14, %cst_10 [1] : vector<8x3xf32> to vector<8xf32>
    %16 = vector.shape_cast %15 : vector<8xf32> to vector<1x8xf32>
    %17 = vector.broadcast %16 : vector<1x8xf32> to vector<16x8xf32>
    %18 = arith.addf %13, %17 : vector<16x8xf32>
    %cst_11 = arith.constant 0.000000e+00 : f32
    %19 = vector.broadcast %cst_11 : f32 to vector<16x8xf32>
    %cst_12 = arith.constant dense<0x7F800000> : vector<16xf32>
    %20 = vector.multi_reduction <minimumf>, %18, %cst_12 [1] : vector<16x8xf32> to vector<16xf32>
    %21 = vector.shape_cast %20 : vector<16xf32> to vector<16x1xf32>
    %22 = vector.broadcast %21 : vector<16x1xf32> to vector<16x8xf32>
    %23 = arith.cmpf oeq, %18, %22 : vector<16x8xf32>
    %cst_13 = arith.constant 9.99999993E-9 : f32
    %24 = vector.broadcast %cst_13 : f32 to vector<16x1xf32>
    %25 = arith.addf %21, %24 : vector<16x1xf32>
    %26 = tpu.reciprocal %25 {approx = true} : vector<16x1xf32> -> vector<16x1xf32>
    %cst_14 = arith.constant 0.000000e+00 : f32
    %27 = vector.shape_cast %26 : vector<16x1xf32> to vector<16x1xf32>
    %28 = vector.broadcast %27 : vector<16x1xf32> to vector<16x8xf32>
    %29 = vector.broadcast %cst_14 : f32 to vector<16x8xf32>
    %30 = arith.select %23, %28, %29 : vector<16x8xi1>, vector<16x8xf32>
    %31 = arith.addf %19, %30 : vector<16x8xf32>
    %cst_15 = arith.constant 1.000000e+30 : f32
    %32 = vector.broadcast %cst_15 : f32 to vector<16x8xf32>
    %33 = arith.select %23, %32, %18 : vector<16x8xi1>, vector<16x8xf32>
    %cst_16 = arith.constant dense<0x7F800000> : vector<16xf32>
    %34 = vector.multi_reduction <minimumf>, %33, %cst_16 [1] : vector<16x8xf32> to vector<16xf32>
    %35 = vector.shape_cast %34 : vector<16xf32> to vector<16x1xf32>
    %36 = vector.broadcast %35 : vector<16x1xf32> to vector<16x8xf32>
    %37 = arith.cmpf oeq, %33, %36 : vector<16x8xf32>
    %cst_17 = arith.constant 9.99999993E-9 : f32
    %38 = vector.broadcast %cst_17 : f32 to vector<16x1xf32>
    %39 = arith.addf %35, %38 : vector<16x1xf32>
    %40 = tpu.reciprocal %39 {approx = true} : vector<16x1xf32> -> vector<16x1xf32>
    %cst_18 = arith.constant 0.000000e+00 : f32
    %41 = vector.shape_cast %40 : vector<16x1xf32> to vector<16x1xf32>
    %42 = vector.broadcast %41 : vector<16x1xf32> to vector<16x8xf32>
    %43 = vector.broadcast %cst_18 : f32 to vector<16x8xf32>
    %44 = arith.select %37, %42, %43 : vector<16x8xi1>, vector<16x8xf32>
    %45 = arith.addf %31, %44 : vector<16x8xf32>
    %cst_19 = arith.constant 1.000000e+30 : f32
    %46 = vector.broadcast %cst_19 : f32 to vector<16x8xf32>
    %47 = arith.select %37, %46, %33 : vector<16x8xi1>, vector<16x8xf32>
    %cst_20 = arith.constant dense<0x7F800000> : vector<16xf32>
    %48 = vector.multi_reduction <minimumf>, %47, %cst_20 [1] : vector<16x8xf32> to vector<16xf32>
    %49 = vector.shape_cast %48 : vector<16xf32> to vector<16x1xf32>
    %50 = vector.broadcast %49 : vector<16x1xf32> to vector<16x8xf32>
    %51 = arith.cmpf oeq, %47, %50 : vector<16x8xf32>
    %cst_21 = arith.constant 9.99999993E-9 : f32
    %52 = vector.broadcast %cst_21 : f32 to vector<16x1xf32>
    %53 = arith.addf %49, %52 : vector<16x1xf32>
    %54 = tpu.reciprocal %53 {approx = true} : vector<16x1xf32> -> vector<16x1xf32>
    %cst_22 = arith.constant 0.000000e+00 : f32
    %55 = vector.shape_cast %54 : vector<16x1xf32> to vector<16x1xf32>
    %56 = vector.broadcast %55 : vector<16x1xf32> to vector<16x8xf32>
    %57 = vector.broadcast %cst_22 : f32 to vector<16x8xf32>
    %58 = arith.select %51, %56, %57 : vector<16x8xi1>, vector<16x8xf32>
    %59 = arith.addf %45, %58 : vector<16x8xf32>
    %cst_23 = arith.constant dense<0.000000e+00> : vector<16xf32>
    %60 = vector.multi_reduction <add>, %59, %cst_23 [1] : vector<16x8xf32> to vector<16xf32>
    %61 = vector.shape_cast %60 : vector<16xf32> to vector<16x1xf32>
    %62 = tpu.reciprocal %61 {approx = true} : vector<16x1xf32> -> vector<16x1xf32>
    %63 = vector.broadcast %62 : vector<16x1xf32> to vector<16x8xf32>
    %64 = arith.mulf %59, %63 : vector<16x8xf32>
    %cst_24 = arith.constant dense<0.000000e+00> : vector<16x8xf32>
    %65 = tpu.matmul %64, %5, %cst_24 {dimension_numbers = #tpu.dot_dimension_numbers<[1], [0], [0], [1], [0, 0, 1, 1], [], []>} : vector<16x8xf32>, vector<8x8xf32>, vector<16x8xf32> -> vector<16x8xf32>
    %66 = arith.truncf %65 : vector<16x8xf32> to vector<16x8xbf16>
    %c0_25 = arith.constant 0 : index
    %c0_26 = arith.constant 0 : index
    %67 = vector.load %arg7[%c0_25, %c0_26] : memref<8x128xbf16, #tpu.memory_space<vmem>>, vector<8x128xbf16>
    %cst_27 = arith.constant dense<0.000000e+00> : vector<16x128xf32>
    %68 = tpu.matmul %66, %67, %cst_27 {dimension_numbers = #tpu.dot_dimension_numbers<[1], [0], [0], [1], [0, 0, 1, 1], [], []>} : vector<16x8xbf16>, vector<8x128xbf16>, vector<16x128xf32> -> vector<16x128xf32>
    %c0_28 = arith.constant 0 : index
    %c0_29 = arith.constant 0 : index
    %c0_30 = arith.constant 0 : index
    %69 = vector.load %arg5[%c0_28, %c0_29, %c0_30] : memref<1x16x8xf32, #tpu.memory_space<vmem>>, vector<1x16x8xf32>
    %70 = vector.shape_cast %69 : vector<1x16x8xf32> to vector<16x8xf32>
    %71 = arith.truncf %70 : vector<16x8xf32> to vector<16x8xbf16>
    %c0_31 = arith.constant 0 : index
    %c0_32 = arith.constant 0 : index
    %72 = vector.load %arg6[%c0_31, %c0_32] : memref<8x128xbf16, #tpu.memory_space<vmem>>, vector<8x128xbf16>
    %cst_33 = arith.constant dense<0.000000e+00> : vector<16x128xf32>
    %73 = tpu.matmul %71, %72, %cst_33 {dimension_numbers = #tpu.dot_dimension_numbers<[1], [0], [0], [1], [0, 0, 1, 1], [], []>} : vector<16x8xbf16>, vector<8x128xbf16>, vector<16x128xf32> -> vector<16x128xf32>
    %74 = arith.addf %68, %73 : vector<16x128xf32>
    %c0_34 = arith.constant 0 : index
    %c0_35 = arith.constant 0 : index
    %75 = vector.load %arg8[%c0_34, %c0_35] : memref<1x128xf32, #tpu.memory_space<vmem>>, vector<1x128xf32>
    %76 = vector.broadcast %75 : vector<1x128xf32> to vector<16x128xf32>
    %77 = arith.addf %74, %76 : vector<16x128xf32>
    %cst_36 = arith.constant 0.000000e+00 : f32
    %78 = vector.broadcast %cst_36 : f32 to vector<16x128xf32>
    %79 = arith.maximumf %77, %78 : vector<16x128xf32>
    %80 = arith.truncf %79 : vector<16x128xf32> to vector<16x128xbf16>
    %c0_37 = arith.constant 0 : index
    %c0_38 = arith.constant 0 : index
    %81 = vector.load %arg9[%c0_37, %c0_38] : memref<128x128xbf16, #tpu.memory_space<vmem>>, vector<128x128xbf16>
    %cst_39 = arith.constant dense<0.000000e+00> : vector<16x128xf32>
    %82 = tpu.matmul %80, %81, %cst_39 {dimension_numbers = #tpu.dot_dimension_numbers<[1], [0], [0], [1], [0, 0, 1, 1], [], []>} : vector<16x128xbf16>, vector<128x128xbf16>, vector<16x128xf32> -> vector<16x128xf32>
    %c0_40 = arith.constant 0 : index
    %c0_41 = arith.constant 0 : index
    %83 = vector.load %arg10[%c0_40, %c0_41] : memref<1x128xf32, #tpu.memory_space<vmem>>, vector<1x128xf32>
    %84 = vector.broadcast %83 : vector<1x128xf32> to vector<16x128xf32>
    %85 = arith.addf %82, %84 : vector<16x128xf32>
    %86 = arith.truncf %85 : vector<16x128xf32> to vector<16x128xbf16>
    %c0_42 = arith.constant 0 : index
    %c0_43 = arith.constant 0 : index
    %87 = vector.load %arg11[%c0_42, %c0_43] : memref<128x128xbf16, #tpu.memory_space<vmem>>, vector<128x128xbf16>
    %cst_44 = arith.constant dense<0.000000e+00> : vector<16x128xf32>
    %88 = tpu.matmul %86, %87, %cst_44 {dimension_numbers = #tpu.dot_dimension_numbers<[1], [0], [0], [1], [0, 0, 1, 1], [], []>} : vector<16x128xbf16>, vector<128x128xbf16>, vector<16x128xf32> -> vector<16x128xf32>
    %c0_45 = arith.constant 0 : index
    %c0_46 = arith.constant 0 : index
    %89 = vector.load %arg12[%c0_45, %c0_46] : memref<1x128xf32, #tpu.memory_space<vmem>>, vector<1x128xf32>
    %90 = vector.broadcast %89 : vector<1x128xf32> to vector<16x128xf32>
    %91 = arith.addf %88, %90 : vector<16x128xf32>
    %cst_47 = arith.constant 0.000000e+00 : f32
    %92 = vector.broadcast %cst_47 : f32 to vector<16x128xf32>
    %93 = arith.maximumf %91, %92 : vector<16x128xf32>
    %94 = arith.truncf %93 : vector<16x128xf32> to vector<16x128xbf16>
    %c0_48 = arith.constant 0 : index
    %c0_49 = arith.constant 0 : index
    %95 = vector.load %arg13[%c0_48, %c0_49] : memref<128x128xbf16, #tpu.memory_space<vmem>>, vector<128x128xbf16>
    %cst_50 = arith.constant dense<0.000000e+00> : vector<16x128xf32>
    %96 = tpu.matmul %94, %95, %cst_50 {dimension_numbers = #tpu.dot_dimension_numbers<[1], [0], [0], [1], [0, 0, 1, 1], [], []>} : vector<16x128xbf16>, vector<128x128xbf16>, vector<16x128xf32> -> vector<16x128xf32>
    %c0_51 = arith.constant 0 : index
    %c0_52 = arith.constant 0 : index
    %97 = vector.load %arg14[%c0_51, %c0_52] : memref<1x128xf32, #tpu.memory_space<vmem>>, vector<1x128xf32>
    %98 = vector.broadcast %97 : vector<1x128xf32> to vector<16x128xf32>
    %99 = arith.addf %96, %98 : vector<16x128xf32>
    %100 = arith.truncf %99 : vector<16x128xf32> to vector<16x128xbf16>
    %c0_53 = arith.constant 0 : index
    %c0_54 = arith.constant 0 : index
    %101 = vector.load %arg15[%c0_53, %c0_54] : memref<128x128xbf16, #tpu.memory_space<vmem>>, vector<128x128xbf16>
    %cst_55 = arith.constant dense<0.000000e+00> : vector<16x128xf32>
    %102 = tpu.matmul %100, %101, %cst_55 {dimension_numbers = #tpu.dot_dimension_numbers<[1], [0], [0], [1], [0, 0, 1, 1], [], []>} : vector<16x128xbf16>, vector<128x128xbf16>, vector<16x128xf32> -> vector<16x128xf32>
    %c0_56 = arith.constant 0 : index
    %c0_57 = arith.constant 0 : index
    %103 = vector.load %arg16[%c0_56, %c0_57] : memref<1x128xf32, #tpu.memory_space<vmem>>, vector<1x128xf32>
    %104 = vector.broadcast %103 : vector<1x128xf32> to vector<16x128xf32>
    %105 = arith.addf %102, %104 : vector<16x128xf32>
    %cst_58 = arith.constant 0.000000e+00 : f32
    %106 = vector.broadcast %cst_58 : f32 to vector<16x128xf32>
    %107 = arith.maximumf %105, %106 : vector<16x128xf32>
    %108 = arith.truncf %107 : vector<16x128xf32> to vector<16x128xbf16>
    %c0_59 = arith.constant 0 : index
    %c0_60 = arith.constant 0 : index
    %109 = vector.load %arg17[%c0_59, %c0_60] : memref<128x128xbf16, #tpu.memory_space<vmem>>, vector<128x128xbf16>
    %cst_61 = arith.constant dense<0.000000e+00> : vector<16x128xf32>
    %110 = tpu.matmul %108, %109, %cst_61 {dimension_numbers = #tpu.dot_dimension_numbers<[1], [0], [0], [1], [0, 0, 1, 1], [], []>} : vector<16x128xbf16>, vector<128x128xbf16>, vector<16x128xf32> -> vector<16x128xf32>
    %c0_62 = arith.constant 0 : index
    %c0_63 = arith.constant 0 : index
    %111 = vector.load %arg18[%c0_62, %c0_63] : memref<1x128xf32, #tpu.memory_space<vmem>>, vector<1x128xf32>
    %112 = vector.broadcast %111 : vector<1x128xf32> to vector<16x128xf32>
    %113 = arith.addf %110, %112 : vector<16x128xf32>
    %cst_64 = arith.constant 0.000000e+00 : f32
    %114 = vector.broadcast %cst_64 : f32 to vector<16x128xf32>
    %115 = arith.maximumf %113, %114 : vector<16x128xf32>
    %116 = arith.addf %115, %99 : vector<16x128xf32>
    %cst_65 = arith.constant 0.000000e+00 : f32
    %117 = vector.broadcast %cst_65 : f32 to vector<16x128xf32>
    %118 = arith.maximumf %116, %117 : vector<16x128xf32>
    %c0_66 = arith.constant 0 : index
    %c0_67 = arith.constant 0 : index
    %c0_68 = arith.constant 0 : index
    %119 = vector.load %arg19[%c0_66, %c0_67, %c0_68] : memref<1x16x128xf32, #tpu.memory_space<vmem>>, vector<1x16x128xf32>
    %120 = vector.shape_cast %119 : vector<1x16x128xf32> to vector<16x128xf32>
    %121 = vector.shape_cast %118 : vector<16x128xf32> to vector<1x16x128xf32>
    tpu.vector_store %arg19[%c0_66, %c0_67, %c0_68], %121 {strides = array<i32>} : memref<1x16x128xf32, #tpu.memory_space<vmem>>, vector<1x16x128xf32>,
    return
  }
  func.func @transform_0(%arg0: i32, %arg1: i32) -> (i32, i32, i32) {
    %c0_i32 = arith.constant 0 : i32
    %c0_i32_0 = arith.constant 0 : i32
    return %arg0, %arg1, %c0_i32 : i32, i32, i32
  }
  func.func @transform_1(%arg0: i32, %arg1: i32) -> (i32, i32, i32) {
    %c0_i32 = arith.constant 0 : i32
    %c0_i32_0 = arith.constant 0 : i32
    %c0_i32_1 = arith.constant 0 : i32
    return %arg0, %c0_i32, %c0_i32_0 : i32, i32, i32
  }
  func.func @transform_2(%arg0: i32, %arg1: i32) -> (i32, i32, i32) {
    %c0_i32 = arith.constant 0 : i32
    %c0_i32_0 = arith.constant 0 : i32
    %c0_i32_1 = arith.constant 0 : i32
    return %arg0, %c0_i32, %c0_i32_0 : i32, i32, i32
  }
  func.func @transform_3(%arg0: i32, %arg1: i32) -> (i32, i32, i32) {
    %c0_i32 = arith.constant 0 : i32
    %c0_i32_0 = arith.constant 0 : i32
    return %arg0, %arg1, %c0_i32 : i32, i32, i32
  }
  func.func @transform_4(%arg0: i32, %arg1: i32) -> (i32, i32) {
    %c0_i32 = arith.constant 0 : i32
    %c0_i32_0 = arith.constant 0 : i32
    %c0_i32_1 = arith.constant 0 : i32
    return %c0_i32, %c0_i32_0 : i32, i32
  }
  func.func @transform_5(%arg0: i32, %arg1: i32) -> (i32, i32) {
    %c0_i32 = arith.constant 0 : i32
    %c0_i32_0 = arith.constant 0 : i32
    %c0_i32_1 = arith.constant 0 : i32
    return %c0_i32, %c0_i32_0 : i32, i32
  }
  func.func @transform_6(%arg0: i32, %arg1: i32) -> (i32, i32) {
    %c0_i32 = arith.constant 0 : i32
    %c0_i32_0 = arith.constant 0 : i32
    %c0_i32_1 = arith.constant 0 : i32
    return %c0_i32, %c0_i32_0 : i32, i32
  }
  func.func @transform_7(%arg0: i32, %arg1: i32) -> (i32, i32) {
    %c0_i32 = arith.constant 0 : i32
    %c0_i32_0 = arith.constant 0 : i32
    %c0_i32_1 = arith.constant 0 : i32
    return %c0_i32, %c0_i32_0 : i32, i32
  }
  func.func @transform_8(%arg0: i32, %arg1: i32) -> (i32, i32) {
    %c0_i32 = arith.constant 0 : i32
    %c0_i32_0 = arith.constant 0 : i32
    %c0_i32_1 = arith.constant 0 : i32
    return %c0_i32, %c0_i32_0 : i32, i32
  }
  func.func @transform_9(%arg0: i32, %arg1: i32) -> (i32, i32) {
    %c0_i32 = arith.constant 0 : i32
    %c0_i32_0 = arith.constant 0 : i32
    %c0_i32_1 = arith.constant 0 : i32
    return %c0_i32, %c0_i32_0 : i32, i32
  }
  func.func @transform_10(%arg0: i32, %arg1: i32) -> (i32, i32) {
    %c0_i32 = arith.constant 0 : i32
    %c0_i32_0 = arith.constant 0 : i32
    %c0_i32_1 = arith.constant 0 : i32
    return %c0_i32, %c0_i32_0 : i32, i32
  }
  func.func @transform_11(%arg0: i32, %arg1: i32) -> (i32, i32) {
    %c0_i32 = arith.constant 0 : i32
    %c0_i32_0 = arith.constant 0 : i32
    %c0_i32_1 = arith.constant 0 : i32
    return %c0_i32, %c0_i32_0 : i32, i32
  }
  func.func @transform_12(%arg0: i32, %arg1: i32) -> (i32, i32) {
    %c0_i32 = arith.constant 0 : i32
    %c0_i32_0 = arith.constant 0 : i32
    %c0_i32_1 = arith.constant 0 : i32
    return %c0_i32, %c0_i32_0 : i32, i32
  }
  func.func @transform_13(%arg0: i32, %arg1: i32) -> (i32, i32) {
    %c0_i32 = arith.constant 0 : i32
    %c0_i32_0 = arith.constant 0 : i32
    %c0_i32_1 = arith.constant 0 : i32
    return %c0_i32, %c0_i32_0 : i32, i32
  }
  func.func @transform_14(%arg0: i32, %arg1: i32) -> (i32, i32) {
    %c0_i32 = arith.constant 0 : i32
    %c0_i32_0 = arith.constant 0 : i32
    %c0_i32_1 = arith.constant 0 : i32
    return %c0_i32, %c0_i32_0 : i32, i32
  }
  func.func @transform_15(%arg0: i32, %arg1: i32) -> (i32, i32) {
    %c0_i32 = arith.constant 0 : i32
    %c0_i32_0 = arith.constant 0 : i32
    %c0_i32_1 = arith.constant 0 : i32
    return %c0_i32, %c0_i32_0 : i32, i32
  }
  func.func @transform_16(%arg0: i32, %arg1: i32) -> (i32, i32) {
    %c0_i32 = arith.constant 0 : i32
    %c0_i32_0 = arith.constant 0 : i32
    %c0_i32_1 = arith.constant 0 : i32
    return %c0_i32, %c0_i32_0 : i32, i32
  }
  func.func @transform_17(%arg0: i32, %arg1: i32) -> (i32, i32, i32) {
    %c0_i32 = arith.constant 0 : i32
    %c0_i32_0 = arith.constant 0 : i32
    return %arg0, %arg1, %c0_i32 : i32, i32, i32
  }
}

</mosaic_0001>

<llo_original>
// kernel: tpu_custom_call.1
$region0: #{tpu_custom_call.1}
  #allocation0 [shape = 'u32[]', space=smem, size = 0x4, offset = 0x4, fixed_abs, tag = 'smem constant byte address 0x4 - core index']
  #allocation1 [shape = 'u32[144,128]{1,0:T(1,128)}', space=vmem, size = 0x12000, scoped, tag = 'internal scratch']
  %s0 = inlined_call_operand.vmem [shape: f32[2,16,3], index: 0, kind: input, shape index: {}]
  %s1 = inlined_call_operand.vmem [shape: f32[2,8,3], index: 1, kind: input, shape index: {}]
  %s2 = inlined_call_operand.hbm [shape: f32[2,8,8], index: 2, kind: input, shape index: {}]
  %s3 = inlined_call_operand.vmem [shape: f32[2,16,8], index: 3, kind: input, shape index: {}]
  %s4 = inlined_call_operand.hbm [shape: bf16[8,128], index: 4, kind: input, shape index: {}]
  %s5 = inlined_call_operand.hbm [shape: bf16[8,128], index: 5, kind: input, shape index: {}]
  %s6 = inlined_call_operand.vmem [shape: f32[1,128], index: 6, kind: input, shape index: {}]
  %s7 = inlined_call_operand.vmem [shape: bf16[128,128], index: 7, kind: input, shape index: {}]
  %s8 = inlined_call_operand.vmem [shape: f32[1,128], index: 8, kind: input, shape index: {}]
  %s9 = inlined_call_operand.vmem [shape: bf16[128,128], index: 9, kind: input, shape index: {}]
  %s10 = inlined_call_operand.vmem [shape: f32[1,128], index: 10, kind: input, shape index: {}]
  %s11 = inlined_call_operand.hbm [shape: bf16[128,128], index: 11, kind: input, shape index: {}]
  %s12 = inlined_call_operand.vmem [shape: f32[1,128], index: 12, kind: input, shape index: {}]
  %s13 = inlined_call_operand.hbm [shape: bf16[128,128], index: 13, kind: input, shape index: {}]
  %s14 = inlined_call_operand.vmem [shape: f32[1,128], index: 14, kind: input, shape index: {}]
  %s15 = inlined_call_operand.hbm [shape: bf16[128,128], index: 15, kind: input, shape index: {}]
  %s16 = inlined_call_operand.vmem [shape: f32[1,128], index: 16, kind: input, shape index: {}]
  %s17 = inlined_call_operand.hbm [shape: f32[2,16,128], index: 17, kind: output, shape index: {}]
  %s18 = sld [smem:[#allocation0]]
  $region125: #{tpu_custom_call.1} parent=0
    _
  %s20 = ssub.s32 1, %s18
  %s21 = scalar_select 0, %s20, %s18
  $region1: #{tpu_custom_call.1} parent=0
    #allocation2 [shape = 'u8[8192]{0}', space=vmem, size = 0x2000, scoped, tag = 'input window, operand 2']
    #allocation3 [shape = 's32[2]{0}', space=sflag, size = 0x8, scoped, tag = 'scoped memory for tpu_custom_call.1']
    #allocation4 [shape = 's32[2]{0}', space=sflag, size = 0x8, scoped, tag = 'scoped memory for tpu_custom_call.1']
    #allocation5 [shape = 'u8[2048]{0}', space=vmem, size = 0x800, scoped, tag = 'input window, operand 4, single buffered']
    #allocation6 [shape = 's32[1]{0}', space=sflag, size = 0x4, scoped, tag = 'scoped memory for tpu_custom_call.1']
    #allocation7 [shape = 'u8[2048]{0}', space=vmem, size = 0x800, scoped, tag = 'input window, operand 5, single buffered']
    #allocation8 [shape = 'u8[32768]{0}', space=vmem, size = 0x8000, scoped, tag = 'input window, operand 11, single buffered']
    #allocation9 [shape = 's32[1]{0}', space=sflag, size = 0x4, scoped, tag = 'scoped memory for tpu_custom_call.1']
    #allocation10 [shape = 'u8[32768]{0}', space=vmem, size = 0x8000, scoped, tag = 'input window, operand 13, single buffered']
    #allocation11 [shape = 'u8[32768]{0}', space=vmem, size = 0x8000, scoped, tag = 'input window, operand 15, single buffered']
    #allocation12 [shape = 's32[1]{0}', space=sflag, size = 0x4, scoped, tag = 'scoped memory for tpu_custom_call.1']
    #allocation13 [shape = 'u8[16384]{0}', space=vmem, size = 0x4000, scoped, tag = 'output window, operand 0']
    %22 = vsyncpa [#allocation3], 0
    %s23 = scalar_lea.sflag [#allocation3], 1
    %24 = vsyncpa %s23, 0
    %25 = vsyncpa [#allocation6], 0
    %26 = vsyncpa [#allocation9], 0
    %27 = vsyncpa [#allocation12], 0
    %28 = vsyncpa [#allocation4], 0
    %s29 = scalar_lea.sflag [#allocation4], 1
    %30 = vsyncpa %s29, 0
    loop: start=0, step=1, limit=4
    $region2: #{tpu_custom_call.1} parent=1 // loop_pre_header
      _
    $region3: #{tpu_custom_call.1} parent=1 // loop_header
      %s32 = sphi 0, %s36
      %p33 = scmp.ge.s32.totalorder %s32, 4
      %s39 = sphi 0, %s51
      %s40 = sphi 0, %s47
      %s41 = sphi 0, %s39
      %s42 = sphi 0, %s40
      %s43 = sphi 0, %s41
      %s44 = sphi 0, %s42
      %s56 = sphi 0, %s58
      %s59 = sphi 0, %s56
      %s60 = sphi 0, %s59
      %s76 = sphi 0, %s60
      %s82 = sphi 0, %s84
      %s85 = sphi 0, %s82
      %s86 = sphi 0, %s85
      %s102 = sphi 0, %s86
      %s108 = sphi 0, %s110
      %s111 = sphi 0, %s108
      %s112 = sphi 0, %s111
      %s128 = sphi 0, %s112
      %s136 = sphi 0, %s138
      %s139 = sphi 0, %s136
      %s140 = sphi 0, %s139
      %s156 = sphi 0, %s140
      %s160 = sphi 0, %s160
      %s162 = sphi 0, %s160
      %s163 = sphi 0, %s162
      %s177 = sphi 0, %s163
      %s181 = sphi 0, %s181
      %s183 = sphi 0, %s181
      %s184 = sphi 0, %s183
      %s198 = sphi 0, %s184
      %s202 = sphi 0, %s202
      %s204 = sphi 0, %s202
      %s205 = sphi 0, %s204
      %s219 = sphi 0, %s205
      %s223 = sphi 0, %s223
      %s225 = sphi 0, %s223
      %s226 = sphi 0, %s225
      %s240 = sphi 0, %s226
      %s244 = sphi 0, %s244
      %s246 = sphi 0, %s244
      %s247 = sphi 0, %s246
      %s261 = sphi 0, %s247
      %s265 = sphi 0, %s265
      %s267 = sphi 0, %s265
      %s268 = sphi 0, %s267
      %s282 = sphi 0, %s268
      %s286 = sphi 0, %s286
      %s288 = sphi 0, %s286
      %s289 = sphi 0, %s288
      %s303 = sphi 0, %s289
      %s307 = sphi 0, %s307
      %s309 = sphi 0, %s307
      %s310 = sphi 0, %s309
      %s324 = sphi 0, %s310
      %s328 = sphi 0, %s328
      %s330 = sphi 0, %s328
      %s331 = sphi 0, %s330
      %s345 = sphi 0, %s331
      %s349 = sphi 0, %s349
      %s351 = sphi 0, %s349
      %s352 = sphi 0, %s351
      %s366 = sphi 0, %s352
      %s370 = sphi 0, %s370
      %s372 = sphi 0, %s370
      %s373 = sphi 0, %s372
      %s387 = sphi 0, %s373
      %s391 = sphi 0, %s391
      %s393 = sphi 0, %s391
      %s394 = sphi 0, %s393
      %s408 = sphi 0, %s394
      %s412 = sphi 0, %s412
      %s414 = sphi 0, %s412
      %s415 = sphi 0, %s414
      %s429 = sphi 0, %s415
      %s437 = sphi 0, %s439
      %s440 = sphi 0, %s437
      %s441 = sphi 0, %s440
      %s457 = sphi 0, %s441
    $region4: #{tpu_custom_call.1} parent=1 // loop_header_branch
      %35 = sbr.rel (%p33) target = $region8
    $region5: #{tpu_custom_call.1} parent=1 // loop_body
      %s37 = ssub.s32 %s32, 1
      %s38 = ssub.s32 %s32, 2
      %s45 = sadd.s32 1, %s40
      %p46 = scmp.ge.s32.totalorder %s45, 1
      %s47 = scalar_select %p46, 0, %s45
      %s48 = sadd.s32 1, %s39
      %s49 = scalar_select %p46, %s48, %s39
      %p50 = scmp.ge.s32.totalorder %s49, 2
      %s51 = scalar_select %p50, 0, %s49
      %s52 = ssub.s32 %s39, %s51
      %s53 = ssub.s32 %s40, %s47
      %s54 = sor.u32 %s52, %s53
      %p55 = scmp.eq.s32.totalorder %s54, 0
      %s57 = sadd.s32 %s56, 1
      %s58 = scalar_select %p55, %s56, %s57
      %p61 = pneg %p55
      %p62 = scmp.eq.s32.totalorder %s32, 1
      %p63 = por %p61, %p62
      %p64 = scmp.ne.s32.totalorder %s56, %s59
      %p65 = scmp.eq.s32.totalorder %s32, 0
      %p66 = por %p64, %p65
      %p67 = scmp.ne.s32.totalorder %s56, %s59
      %p68 = scmp.eq.s32.totalorder %s37, 1
      %p69 = por %p67, %p68
      %p70 = scmp.ne.s32.totalorder %s59, %s60
      %p71 = scmp.eq.s32.totalorder %s37, 0
      %p72 = por %p70, %p71
      %p73 = scmp.ne.s32.totalorder %s59, %s60
      %p74 = scmp.eq.s32.totalorder %s38, 1
      %p75 = por %p73, %p74
      %p77 = scmp.ne.s32.totalorder %s60, %s76
      %p78 = scmp.eq.s32.totalorder %s38, 0
      %p79 = por %p77, %p78
      %s80 = ssub.s32 %s39, %s51
      %p81 = scmp.eq.s32.totalorder %s80, 0
      %s83 = sadd.s32 %s82, 1
      %s84 = scalar_select %p81, %s82, %s83
      %p87 = pneg %p81
      %p88 = scmp.eq.s32.totalorder %s32, 1
      %p89 = por %p87, %p88
      %p90 = scmp.ne.s32.totalorder %s82, %s85
      %p91 = scmp.eq.s32.totalorder %s32, 0
      %p92 = por %p90, %p91
      %p93 = scmp.ne.s32.totalorder %s82, %s85
      %p94 = scmp.eq.s32.totalorder %s37, 1
      %p95 = por %p93, %p94
      %p96 = scmp.ne.s32.totalorder %s85, %s86
      %p97 = scmp.eq.s32.totalorder %s37, 0
      %p98 = por %p96, %p97
      %p99 = scmp.ne.s32.totalorder %s85, %s86
      %p100 = scmp.eq.s32.totalorder %s38, 1
      %p101 = por %p99, %p100
      %p103 = scmp.ne.s32.totalorder %s86, %s102
      %p104 = scmp.eq.s32.totalorder %s38, 0
      %p105 = por %p103, %p104
      %s106 = ssub.s32 %s39, %s51
      %p107 = scmp.eq.s32.totalorder %s106, 0
      %s109 = sadd.s32 %s108, 1
      %s110 = scalar_select %p107, %s108, %s109
      %p113 = pneg %p107
      %p114 = scmp.eq.s32.totalorder %s32, 1
      %p115 = por %p113, %p114
      %p116 = scmp.ne.s32.totalorder %s108, %s111
      %p117 = scmp.eq.s32.totalorder %s32, 0
      %p118 = por %p116, %p117
      %p119 = scmp.ne.s32.totalorder %s108, %s111
      %p120 = scmp.eq.s32.totalorder %s37, 1
      %p121 = por %p119, %p120
      %p122 = scmp.ne.s32.totalorder %s111, %s112
      %p123 = scmp.eq.s32.totalorder %s37, 0
      %p124 = por %p122, %p123
      %p125 = scmp.ne.s32.totalorder %s111, %s112
      %p126 = scmp.eq.s32.totalorder %s38, 1
      %p127 = por %p125, %p126
      %p129 = scmp.ne.s32.totalorder %s112, %s128
      %p130 = scmp.eq.s32.totalorder %s38, 0
      %p131 = por %p129, %p130
      %s132 = ssub.s32 %s39, %s51
      %s133 = ssub.s32 %s40, %s47
      %s134 = sor.u32 %s132, %s133
      %p135 = scmp.eq.s32.totalorder %s134, 0
      %s137 = sadd.s32 %s136, 1
      %s138 = scalar_select %p135, %s136, %s137
      %p141 = pneg %p135
      %p142 = scmp.eq.s32.totalorder %s32, 1
      %p143 = por %p141, %p142
      %p144 = scmp.ne.s32.totalorder %s136, %s139
      %p145 = scmp.eq.s32.totalorder %s32, 0
      %p146 = por %p144, %p145
      %p147 = scmp.ne.s32.totalorder %s136, %s139
      %p148 = scmp.eq.s32.totalorder %s37, 1
      %p149 = por %p147, %p148
      %p150 = scmp.ne.s32.totalorder %s139, %s140
      %p151 = scmp.eq.s32.totalorder %s37, 0
      %p152 = por %p150, %p151
      %p153 = scmp.ne.s32.totalorder %s139, %s140
      %p154 = scmp.eq.s32.totalorder %s38, 1
      %p155 = por %p153, %p154
      %p157 = scmp.ne.s32.totalorder %s140, %s156
      %p158 = scmp.eq.s32.totalorder %s38, 0
      %p159 = por %p157, %p158
      %s161 = sadd.s32 %s160, 1
      %p164 = scmp.eq.s32.totalorder %s32, 1
      %p165 = scmp.ne.s32.totalorder %s160, %s162
      %p166 = scmp.eq.s32.totalorder %s32, 0
      %p167 = por %p165, %p166
      %p168 = scmp.ne.s32.totalorder %s160, %s162
      %p169 = scmp.eq.s32.totalorder %s37, 1
      %p170 = por %p168, %p169
      %p171 = scmp.ne.s32.totalorder %s162, %s163
      %p172 = scmp.eq.s32.totalorder %s37, 0
      %p173 = por %p171, %p172
      %p174 = scmp.ne.s32.totalorder %s162, %s163
      %p175 = scmp.eq.s32.totalorder %s38, 1
      %p176 = por %p174, %p175
      %p178 = scmp.ne.s32.totalorder %s163, %s177
      %p179 = scmp.eq.s32.totalorder %s38, 0
      %p180 = por %p178, %p179
      %s182 = sadd.s32 %s181, 1
      %p185 = scmp.eq.s32.totalorder %s32, 1
      %p186 = scmp.ne.s32.totalorder %s181, %s183
      %p187 = scmp.eq.s32.totalorder %s32, 0
      %p188 = por %p186, %p187
      %p189 = scmp.ne.s32.totalorder %s181, %s183
      %p190 = scmp.eq.s32.totalorder %s37, 1
      %p191 = por %p189, %p190
      %p192 = scmp.ne.s32.totalorder %s183, %s184
      %p193 = scmp.eq.s32.totalorder %s37, 0
      %p194 = por %p192, %p193
      %p195 = scmp.ne.s32.totalorder %s183, %s184
      %p196 = scmp.eq.s32.totalorder %s38, 1
      %p197 = por %p195, %p196
      %p199 = scmp.ne.s32.totalorder %s184, %s198
      %p200 = scmp.eq.s32.totalorder %s38, 0
      %p201 = por %p199, %p200
      %s203 = sadd.s32 %s202, 1
      %p206 = scmp.eq.s32.totalorder %s32, 1
      %p207 = scmp.ne.s32.totalorder %s202, %s204
      %p208 = scmp.eq.s32.totalorder %s32, 0
      %p209 = por %p207, %p208
      %p210 = scmp.ne.s32.totalorder %s202, %s204
      %p211 = scmp.eq.s32.totalorder %s37, 1
      %p212 = por %p210, %p211
      %p213 = scmp.ne.s32.totalorder %s204, %s205
      %p214 = scmp.eq.s32.totalorder %s37, 0
      %p215 = por %p213, %p214
      %p216 = scmp.ne.s32.totalorder %s204, %s205
      %p217 = scmp.eq.s32.totalorder %s38, 1
      %p218 = por %p216, %p217
      %p220 = scmp.ne.s32.totalorder %s205, %s219
      %p221 = scmp.eq.s32.totalorder %s38, 0
      %p222 = por %p220, %p221
      %s224 = sadd.s32 %s223, 1
      %p227 = scmp.eq.s32.totalorder %s32, 1
      %p228 = scmp.ne.s32.totalorder %s223, %s225
      %p229 = scmp.eq.s32.totalorder %s32, 0
      %p230 = por %p228, %p229
      %p231 = scmp.ne.s32.totalorder %s223, %s225
      %p232 = scmp.eq.s32.totalorder %s37, 1
      %p233 = por %p231, %p232
      %p234 = scmp.ne.s32.totalorder %s225, %s226
      %p235 = scmp.eq.s32.totalorder %s37, 0
      %p236 = por %p234, %p235
      %p237 = scmp.ne.s32.totalorder %s225, %s226
      %p238 = scmp.eq.s32.totalorder %s38, 1
      %p239 = por %p237, %p238
      %p241 = scmp.ne.s32.totalorder %s226, %s240
      %p242 = scmp.eq.s32.totalorder %s38, 0
      %p243 = por %p241, %p242
      %s245 = sadd.s32 %s244, 1
      %p248 = scmp.eq.s32.totalorder %s32, 1
      %p249 = scmp.ne.s32.totalorder %s244, %s246
      %p250 = scmp.eq.s32.totalorder %s32, 0
      %p251 = por %p249, %p250
      %p252 = scmp.ne.s32.totalorder %s244, %s246
      %p253 = scmp.eq.s32.totalorder %s37, 1
      %p254 = por %p252, %p253
      %p255 = scmp.ne.s32.totalorder %s246, %s247
      %p256 = scmp.eq.s32.totalorder %s37, 0
      %p257 = por %p255, %p256
      %p258 = scmp.ne.s32.totalorder %s246, %s247
      %p259 = scmp.eq.s32.totalorder %s38, 1
      %p260 = por %p258, %p259
      %p262 = scmp.ne.s32.totalorder %s247, %s261
      %p263 = scmp.eq.s32.totalorder %s38, 0
      %p264 = por %p262, %p263
      %s266 = sadd.s32 %s265, 1
      %p269 = scmp.eq.s32.totalorder %s32, 1
      %p270 = scmp.ne.s32.totalorder %s265, %s267
      %p271 = scmp.eq.s32.totalorder %s32, 0
      %p272 = por %p270, %p271
      %p273 = scmp.ne.s32.totalorder %s265, %s267
      %p274 = scmp.eq.s32.totalorder %s37, 1
      %p275 = por %p273, %p274
      %p276 = scmp.ne.s32.totalorder %s267, %s268
      %p277 = scmp.eq.s32.totalorder %s37, 0
      %p278 = por %p276, %p277
      %p279 = scmp.ne.s32.totalorder %s267, %s268
      %p280 = scmp.eq.s32.totalorder %s38, 1
      %p281 = por %p279, %p280
      %p283 = scmp.ne.s32.totalorder %s268, %s282
      %p284 = scmp.eq.s32.totalorder %s38, 0
      %p285 = por %p283, %p284
      %s287 = sadd.s32 %s286, 1
      %p290 = scmp.eq.s32.totalorder %s32, 1
      %p291 = scmp.ne.s32.totalorder %s286, %s288
      %p292 = scmp.eq.s32.totalorder %s32, 0
      %p293 = por %p291, %p292
      %p294 = scmp.ne.s32.totalorder %s286, %s288
      %p295 = scmp.eq.s32.totalorder %s37, 1
      %p296 = por %p294, %p295
      %p297 = scmp.ne.s32.totalorder %s288, %s289
      %p298 = scmp.eq.s32.totalorder %s37, 0
      %p299 = por %p297, %p298
      %p300 = scmp.ne.s32.totalorder %s288, %s289
      %p301 = scmp.eq.s32.totalorder %s38, 1
      %p302 = por %p300, %p301
      %p304 = scmp.ne.s32.totalorder %s289, %s303
      %p305 = scmp.eq.s32.totalorder %s38, 0
      %p306 = por %p304, %p305
      %s308 = sadd.s32 %s307, 1
      %p311 = scmp.eq.s32.totalorder %s32, 1
      %p312 = scmp.ne.s32.totalorder %s307, %s309
      %p313 = scmp.eq.s32.totalorder %s32, 0
      %p314 = por %p312, %p313
      %p315 = scmp.ne.s32.totalorder %s307, %s309
      %p316 = scmp.eq.s32.totalorder %s37, 1
      %p317 = por %p315, %p316
      %p318 = scmp.ne.s32.totalorder %s309, %s310
      %p319 = scmp.eq.s32.totalorder %s37, 0
      %p320 = por %p318, %p319
      %p321 = scmp.ne.s32.totalorder %s309, %s310
      %p322 = scmp.eq.s32.totalorder %s38, 1
      %p323 = por %p321, %p322
      %p325 = scmp.ne.s32.totalorder %s310, %s324
      %p326 = scmp.eq.s32.totalorder %s38, 0
      %p327 = por %p325, %p326
      %s329 = sadd.s32 %s328, 1
      %p332 = scmp.eq.s32.totalorder %s32, 1
      %p333 = scmp.ne.s32.totalorder %s328, %s330
      %p334 = scmp.eq.s32.totalorder %s32, 0
      %p335 = por %p333, %p334
      %p336 = scmp.ne.s32.totalorder %s328, %s330
      %p337 = scmp.eq.s32.totalorder %s37, 1
      %p338 = por %p336, %p337
      %p339 = scmp.ne.s32.totalorder %s330, %s331
      %p340 = scmp.eq.s32.totalorder %s37, 0
      %p341 = por %p339, %p340
      %p342 = scmp.ne.s32.totalorder %s330, %s331
      %p343 = scmp.eq.s32.totalorder %s38, 1
      %p344 = por %p342, %p343
      %p346 = scmp.ne.s32.totalorder %s331, %s345
      %p347 = scmp.eq.s32.totalorder %s38, 0
      %p348 = por %p346, %p347
      %s350 = sadd.s32 %s349, 1
      %p353 = scmp.eq.s32.totalorder %s32, 1
      %p354 = scmp.ne.s32.totalorder %s349, %s351
      %p355 = scmp.eq.s32.totalorder %s32, 0
      %p356 = por %p354, %p355
      %p357 = scmp.ne.s32.totalorder %s349, %s351
      %p358 = scmp.eq.s32.totalorder %s37, 1
      %p359 = por %p357, %p358
      %p360 = scmp.ne.s32.totalorder %s351, %s352
      %p361 = scmp.eq.s32.totalorder %s37, 0
      %p362 = por %p360, %p361
      %p363 = scmp.ne.s32.totalorder %s351, %s352
      %p364 = scmp.eq.s32.totalorder %s38, 1
      %p365 = por %p363, %p364
      %p367 = scmp.ne.s32.totalorder %s352, %s366
      %p368 = scmp.eq.s32.totalorder %s38, 0
      %p369 = por %p367, %p368
      %s371 = sadd.s32 %s370, 1
      %p374 = scmp.eq.s32.totalorder %s32, 1
      %p375 = scmp.ne.s32.totalorder %s370, %s372
      %p376 = scmp.eq.s32.totalorder %s32, 0
      %p377 = por %p375, %p376
      %p378 = scmp.ne.s32.totalorder %s370, %s372
      %p379 = scmp.eq.s32.totalorder %s37, 1
      %p380 = por %p378, %p379
      %p381 = scmp.ne.s32.totalorder %s372, %s373
      %p382 = scmp.eq.s32.totalorder %s37, 0
      %p383 = por %p381, %p382
      %p384 = scmp.ne.s32.totalorder %s372, %s373
      %p385 = scmp.eq.s32.totalorder %s38, 1
      %p386 = por %p384, %p385
      %p388 = scmp.ne.s32.totalorder %s373, %s387
      %p389 = scmp.eq.s32.totalorder %s38, 0
      %p390 = por %p388, %p389
      %s392 = sadd.s32 %s391, 1
      %p395 = scmp.eq.s32.totalorder %s32, 1
      %p396 = scmp.ne.s32.totalorder %s391, %s393
      %p397 = scmp.eq.s32.totalorder %s32, 0
      %p398 = por %p396, %p397
      %p399 = scmp.ne.s32.totalorder %s391, %s393
      %p400 = scmp.eq.s32.totalorder %s37, 1
      %p401 = por %p399, %p400
      %p402 = scmp.ne.s32.totalorder %s393, %s394
      %p403 = scmp.eq.s32.totalorder %s37, 0
      %p404 = por %p402, %p403
      %p405 = scmp.ne.s32.totalorder %s393, %s394
      %p406 = scmp.eq.s32.totalorder %s38, 1
      %p407 = por %p405, %p406
      %p409 = scmp.ne.s32.totalorder %s394, %s408
      %p410 = scmp.eq.s32.totalorder %s38, 0
      %p411 = por %p409, %p410
      %s413 = sadd.s32 %s412, 1
      %p416 = scmp.eq.s32.totalorder %s32, 1
      %p417 = scmp.ne.s32.totalorder %s412, %s414
      %p418 = scmp.eq.s32.totalorder %s32, 0
      %p419 = por %p417, %p418
      %p420 = scmp.ne.s32.totalorder %s412, %s414
      %p421 = scmp.eq.s32.totalorder %s37, 1
      %p422 = por %p420, %p421
      %p423 = scmp.ne.s32.totalorder %s414, %s415
      %p424 = scmp.eq.s32.totalorder %s37, 0
      %p425 = por %p423, %p424
      %p426 = scmp.ne.s32.totalorder %s414, %s415
      %p427 = scmp.eq.s32.totalorder %s38, 1
      %p428 = por %p426, %p427
      %p430 = scmp.ne.s32.totalorder %s415, %s429
      %p431 = scmp.eq.s32.totalorder %s38, 0
      %p432 = por %p430, %p431
      %s433 = ssub.s32 %s39, %s51
      %s434 = ssub.s32 %s40, %s47
      %s435 = sor.u32 %s433, %s434
      %p436 = scmp.eq.s32.totalorder %s435, 0
      %s438 = sadd.s32 %s437, 1
      %s439 = scalar_select %p436, %s437, %s438
      %p442 = pneg %p436
      %p443 = scmp.eq.s32.totalorder %s32, 1
      %p444 = por %p442, %p443
      %p445 = scmp.ne.s32.totalorder %s437, %s440
      %p446 = scmp.eq.s32.totalorder %s32, 0
      %p447 = por %p445, %p446
      %p448 = scmp.ne.s32.totalorder %s437, %s440
      %p449 = scmp.eq.s32.totalorder %s37, 1
      %p450 = por %p448, %p449
      %p451 = scmp.ne.s32.totalorder %s440, %s441
      %p452 = scmp.eq.s32.totalorder %s37, 0
      %p453 = por %p451, %p452
      %p454 = scmp.ne.s32.totalorder %s440, %s441
      %p455 = scmp.eq.s32.totalorder %s38, 1
      %p456 = por %p454, %p455
      %p458 = scmp.ne.s32.totalorder %s441, %s457
      %p459 = scmp.eq.s32.totalorder %s38, 0
      %p460 = por %p458, %p459
      %p461 = scmp.le.s32.totalorder 1, %s32
      %p462 = scmp.lt.s32.totalorder %s32, 3
      %p463 = pnand %p461, %p462
      %p464 = pneg %p463
      // Predicated region
      $region9: #{tpu_custom_call.1} parent=5 // pred_check
        _
      $region10: #{tpu_custom_call.1} parent=5 // pred_check_branch
        %466 = sbr.rel (%p463) target = $region12
      $region11: #{tpu_custom_call.1} parent=5 // pred_region
        %s467 = ssub.s32 %s32, 1
        // Predicated region
        $region13: #{tpu_custom_call.1} parent=11 // pred_check
          %p468 = pneg %p173
        $region14: #{tpu_custom_call.1} parent=11 // pred_check_branch
          %470 = sbr.rel (%p468) target = $region16
        $region15: #{tpu_custom_call.1} parent=11 // pred_region
          %s472 = ssub.s32 64, 64
          %473 = vsyncadd [#allocation6], %s472
          %s475 = sshll.u32 [#allocation5], 4
          %s476 = int_to_ptr.vmem [resolvable:$true] %s475
          %478 = dma.hbm_to_vmem [thread:$0]  %s4, 64, %s476, [#allocation6]
        $region16: #{tpu_custom_call.1} parent=11 // pred_fallthru
          _
        // Predicated region
        $region17: #{tpu_custom_call.1} parent=11 // pred_check
          %p479 = pneg %p194
        $region18: #{tpu_custom_call.1} parent=11 // pred_check_branch
          %481 = sbr.rel (%p479) target = $region20
        $region19: #{tpu_custom_call.1} parent=11 // pred_region
          %s483 = ssub.s32 64, 64
          %484 = vsyncadd [#allocation6], %s483
          %s486 = sshll.u32 [#allocation7], 4
          %s487 = int_to_ptr.vmem [resolvable:$true] %s486
          %489 = dma.hbm_to_vmem [thread:$0]  %s5, 64, %s487, [#allocation6]
        $region20: #{tpu_custom_call.1} parent=11 // pred_fallthru
          _
        // Predicated region
        $region21: #{tpu_custom_call.1} parent=11 // pred_check
          %p490 = pneg %p215
        $region22: #{tpu_custom_call.1} parent=11 // pred_check_branch
          %492 = sbr.rel (%p490) target = $region24
        $region23: #{tpu_custom_call.1} parent=11 // pred_region
          _
        $region24: #{tpu_custom_call.1} parent=11 // pred_fallthru
          _
        // Predicated region
        $region25: #{tpu_custom_call.1} parent=11 // pred_check
          %p493 = pneg %p236
        $region26: #{tpu_custom_call.1} parent=11 // pred_check_branch
          %495 = sbr.rel (%p493) target = $region28
        $region27: #{tpu_custom_call.1} parent=11 // pred_region
          _
        $region28: #{tpu_custom_call.1} parent=11 // pred_fallthru
          _
        // Predicated region
        $region29: #{tpu_custom_call.1} parent=11 // pred_check
          %p496 = pneg %p257
        $region30: #{tpu_custom_call.1} parent=11 // pred_check_branch
          %498 = sbr.rel (%p496) target = $region32
        $region31: #{tpu_custom_call.1} parent=11 // pred_region
          _
        $region32: #{tpu_custom_call.1} parent=11 // pred_fallthru
          _
        // Predicated region
        $region33: #{tpu_custom_call.1} parent=11 // pred_check
          %p499 = pneg %p278
        $region34: #{tpu_custom_call.1} parent=11 // pred_check_branch
          %501 = sbr.rel (%p499) target = $region36
        $region35: #{tpu_custom_call.1} parent=11 // pred_region
          _
        $region36: #{tpu_custom_call.1} parent=11 // pred_fallthru
          _
        // Predicated region
        $region37: #{tpu_custom_call.1} parent=11 // pred_check
          %p502 = pneg %p299
        $region38: #{tpu_custom_call.1} parent=11 // pred_check_branch
          %504 = sbr.rel (%p502) target = $region40
        $region39: #{tpu_custom_call.1} parent=11 // pred_region
          _
        $region40: #{tpu_custom_call.1} parent=11 // pred_fallthru
          _
        // Predicated region
        $region41: #{tpu_custom_call.1} parent=11 // pred_check
          %p505 = pneg %p320
        $region42: #{tpu_custom_call.1} parent=11 // pred_check_branch
          %507 = sbr.rel (%p505) target = $region44
        $region43: #{tpu_custom_call.1} parent=11 // pred_region
          %s509 = ssub.s32 1024, 1024
          %510 = vsyncadd [#allocation9], %s509
          %s511 = sshll.u32 [#allocation8], 4
          %s512 = int_to_ptr.vmem [resolvable:$true] %s511
          %517 = dma.hbm_to_vmem [thread:$0]  %s11, 1024, %s512, [#allocation9], 64, 64, 4
        $region44: #{tpu_custom_call.1} parent=11 // pred_fallthru
          _
        // Predicated region
        $region45: #{tpu_custom_call.1} parent=11 // pred_check
          %p518 = pneg %p341
        $region46: #{tpu_custom_call.1} parent=11 // pred_check_branch
          %520 = sbr.rel (%p518) target = $region48
        $region47: #{tpu_custom_call.1} parent=11 // pred_region
          _
        $region48: #{tpu_custom_call.1} parent=11 // pred_fallthru
          _
        // Predicated region
        $region49: #{tpu_custom_call.1} parent=11 // pred_check
          %p521 = pneg %p362
        $region50: #{tpu_custom_call.1} parent=11 // pred_check_branch
          %523 = sbr.rel (%p521) target = $region52
        $region51: #{tpu_custom_call.1} parent=11 // pred_region
          %s525 = ssub.s32 1024, 1024
          %526 = vsyncadd [#allocation9], %s525
          %s527 = sshll.u32 [#allocation10], 4
          %s528 = int_to_ptr.vmem [resolvable:$true] %s527
          %533 = dma.hbm_to_vmem [thread:$0]  %s13, 1024, %s528, [#allocation9], 64, 64, 4
        $region52: #{tpu_custom_call.1} parent=11 // pred_fallthru
          _
        // Predicated region
        $region53: #{tpu_custom_call.1} parent=11 // pred_check
          %p534 = pneg %p383
        $region54: #{tpu_custom_call.1} parent=11 // pred_check_branch
          %536 = sbr.rel (%p534) target = $region56
        $region55: #{tpu_custom_call.1} parent=11 // pred_region
          _
        $region56: #{tpu_custom_call.1} parent=11 // pred_fallthru
          _
        // Predicated region
        $region57: #{tpu_custom_call.1} parent=11 // pred_check
          %p537 = pneg %p404
        $region58: #{tpu_custom_call.1} parent=11 // pred_check_branch
          %539 = sbr.rel (%p537) target = $region60
        $region59: #{tpu_custom_call.1} parent=11 // pred_region
          %s541 = ssub.s32 1024, 1024
          %542 = vsyncadd [#allocation12], %s541
          %s543 = sshll.u32 [#allocation11], 4
          %s544 = int_to_ptr.vmem [resolvable:$true] %s543
          %549 = dma.hbm_to_vmem [thread:$0]  %s15, 1024, %s544, [#allocation12], 64, 64, 4
        $region60: #{tpu_custom_call.1} parent=11 // pred_fallthru
          _
        // Predicated region
        $region61: #{tpu_custom_call.1} parent=11 // pred_check
          %p550 = pneg %p425
        $region62: #{tpu_custom_call.1} parent=11 // pred_check_branch
          %552 = sbr.rel (%p550) target = $region64
        $region63: #{tpu_custom_call.1} parent=11 // pred_region
          _
        $region64: #{tpu_custom_call.1} parent=11 // pred_fallthru
          _
      $region12: #{tpu_custom_call.1} parent=5 // pred_fallthru
        _
      %p553 = scmp.lt.s32.totalorder %s32, 2
      // Predicated region
      $region65: #{tpu_custom_call.1} parent=5 // pred_check
        %p554 = pneg %p553
      $region66: #{tpu_custom_call.1} parent=5 // pred_check_branch
        %556 = sbr.rel (%p554) target = $region68
      $region67: #{tpu_custom_call.1} parent=5 // pred_region
        // Predicated region
        $region69: #{tpu_custom_call.1} parent=67 // pred_check
          %p557 = pneg %p66
        $region70: #{tpu_custom_call.1} parent=67 // pred_check_branch
          %559 = sbr.rel (%p557) target = $region72
        $region71: #{tpu_custom_call.1} parent=67 // pred_region
          %s560 = smul.u32 2, %s40
          %p561 = scmp.lt.s32.totalorder %s39, 1
          %s562 = scalar_select %p561, %s39, 1
          %p563 = scmp.lt.s32.totalorder %s560, 1
          %s564 = scalar_select %p563, %s560, 1
          %s565 = smul.addr %s562, 2
          %s566 = sadd.s32 %s564, %s565
          %s567 = smul.addr %s566, 8
          %s568 = scalar_lea.vmem %s0, %s567
          %s569 = smul.u32 2, %s40
        $region72: #{tpu_custom_call.1} parent=67 // pred_fallthru
          _
        // Predicated region
        $region73: #{tpu_custom_call.1} parent=67 // pred_check
          %p570 = pneg %p92
        $region74: #{tpu_custom_call.1} parent=67 // pred_check_branch
          %572 = sbr.rel (%p570) target = $region76
        $region75: #{tpu_custom_call.1} parent=67 // pred_region
          %p573 = scmp.lt.s32.totalorder %s39, 1
          %s574 = scalar_select %p573, %s39, 1
          %s575 = smul.addr %s574, 8
          %s576 = scalar_lea.vmem %s1, %s575
        $region76: #{tpu_custom_call.1} parent=67 // pred_fallthru
          _
        // Predicated region
        $region77: #{tpu_custom_call.1} parent=67 // pred_check
          %p577 = pneg %p118
        $region78: #{tpu_custom_call.1} parent=67 // pred_check_branch
          %579 = sbr.rel (%p577) target = $region80
        $region79: #{tpu_custom_call.1} parent=67 // pred_region
          %s580 = sand.u32 %s108, 1
          %s581 = scalar_lea.sflag [#allocation3], %s580
          %s582 = sand.u32 %s108, 1
          %s583 = smul.addr %s582, 8
          %s584 = scalar_lea.vmem [#allocation2], %s583
          %s586 = ssub.s32 128, 128
          %587 = vsyncadd %s581, %s586
          %s588 = smul.addr %s39, 128
          %s589 = scalar_lea.hbm %s2, %s588
          %s591 = sshll.u32 %s584, 4
          %s592 = int_to_ptr.vmem [resolvable:$true] %s591
          %594 = dma.hbm_to_vmem [thread:$0]  %s589, 128, %s592, %s581
        $region80: #{tpu_custom_call.1} parent=67 // pred_fallthru
          _
        // Predicated region
        $region81: #{tpu_custom_call.1} parent=67 // pred_check
          %p595 = pneg %p146
        $region82: #{tpu_custom_call.1} parent=67 // pred_check_branch
          %597 = sbr.rel (%p595) target = $region84
        $region83: #{tpu_custom_call.1} parent=67 // pred_region
          %s598 = smul.u32 2, %s40
          %p599 = scmp.lt.s32.totalorder %s39, 1
          %s600 = scalar_select %p599, %s39, 1
          %p601 = scmp.lt.s32.totalorder %s598, 1
          %s602 = scalar_select %p601, %s598, 1
          %s603 = smul.addr %s600, 2
          %s604 = sadd.s32 %s602, %s603
          %s605 = smul.addr %s604, 8
          %s606 = scalar_lea.vmem %s3, %s605
          %s607 = smul.u32 2, %s40
        $region84: #{tpu_custom_call.1} parent=67 // pred_fallthru
          _
      $region68: #{tpu_custom_call.1} parent=5 // pred_fallthru
        _
      %p608 = scmp.le.s32.totalorder 1, %s32
      %p609 = scmp.lt.s32.totalorder %s32, 3
      %p610 = pnand %p608, %p609
      %p611 = pneg %p610
      // Predicated region
      $region85: #{tpu_custom_call.1} parent=5 // pred_check
        _
      $region86: #{tpu_custom_call.1} parent=5 // pred_check_branch
        %613 = sbr.rel (%p610) target = $region88
      $region87: #{tpu_custom_call.1} parent=5 // pred_region
        %s614 = ssub.s32 %s32, 1
        %s615 = sand.u32 %s111, 1
        %s616 = scalar_lea.sflag [#allocation3], %s615
        %s617 = sand.u32 %s111, 1
        %s618 = smul.addr %s617, 8
        %s619 = scalar_lea.vmem [#allocation2], %s618
        // Predicated region
        $region89: #{tpu_custom_call.1} parent=87 // pred_check
          %p620 = pneg %p124
        $region90: #{tpu_custom_call.1} parent=87 // pred_check_branch
          %622 = sbr.rel (%p620) target = $region92
        $region91: #{tpu_custom_call.1} parent=87 // pred_region
          %623 = dma.done %s616, 128
        $region92: #{tpu_custom_call.1} parent=87 // pred_fallthru
          _
        // Predicated region
        $region93: #{tpu_custom_call.1} parent=87 // pred_check
          %p624 = pneg %p173
        $region94: #{tpu_custom_call.1} parent=87 // pred_check_branch
          %626 = sbr.rel (%p624) target = $region96
        $region95: #{tpu_custom_call.1} parent=87 // pred_region
          %627 = dma.done [#allocation6], 64
        $region96: #{tpu_custom_call.1} parent=87 // pred_fallthru
          _
        // Predicated region
        $region97: #{tpu_custom_call.1} parent=87 // pred_check
          %p628 = pneg %p194
        $region98: #{tpu_custom_call.1} parent=87 // pred_check_branch
          %630 = sbr.rel (%p628) target = $region100
        $region99: #{tpu_custom_call.1} parent=87 // pred_region
          %631 = dma.done [#allocation6], 64
        $region100: #{tpu_custom_call.1} parent=87 // pred_fallthru
          _
        // Predicated region
        $region101: #{tpu_custom_call.1} parent=87 // pred_check
          %p632 = pneg %p320
        $region102: #{tpu_custom_call.1} parent=87 // pred_check_branch
          %634 = sbr.rel (%p632) target = $region104
        $region103: #{tpu_custom_call.1} parent=87 // pred_region
          %635 = dma.done [#allocation9], 1024
        $region104: #{tpu_custom_call.1} parent=87 // pred_fallthru
          _
        // Predicated region
        $region105: #{tpu_custom_call.1} parent=87 // pred_check
          %p636 = pneg %p362
        $region106: #{tpu_custom_call.1} parent=87 // pred_check_branch
          %638 = sbr.rel (%p636) target = $region108
        $region107: #{tpu_custom_call.1} parent=87 // pred_region
          %639 = dma.done [#allocation9], 1024
        $region108: #{tpu_custom_call.1} parent=87 // pred_fallthru
          _
        // Predicated region
        $region109: #{tpu_custom_call.1} parent=87 // pred_check
          %p640 = pneg %p404
        $region110: #{tpu_custom_call.1} parent=87 // pred_check_branch
          %642 = sbr.rel (%p640) target = $region112
        $region111: #{tpu_custom_call.1} parent=87 // pred_region
          %643 = dma.done [#allocation12], 1024
        $region112: #{tpu_custom_call.1} parent=87 // pred_fallthru
          _
        %s644 = smul.u32 2, %s42
        %p645 = scmp.lt.s32.totalorder %s41, 1
        %s646 = scalar_select %p645, %s41, 1
        %p647 = scmp.lt.s32.totalorder %s644, 1
        %s648 = scalar_select %p647, %s644, 1
        %s649 = smul.addr %s646, 2
        %s650 = sadd.s32 %s648, %s649
        %s651 = smul.addr %s650, 8
        %s652 = scalar_lea.vmem %s0, %s651
        %p653 = pneg %p72
        %p654 = pneg %p69
        %p655 = scmp.lt.s32.totalorder %s41, 1
        %s656 = scalar_select %p655, %s41, 1
        %s657 = smul.addr %s656, 8
        %s658 = scalar_lea.vmem %s1, %s657
        %p659 = pneg %p98
        %p660 = pneg %p95
        %s661 = sand.u32 %s111, 1
        %s662 = scalar_lea.sflag [#allocation3], %s661
        %s663 = sand.u32 %s111, 1
        %s664 = smul.addr %s663, 8
        %s665 = scalar_lea.vmem [#allocation2], %s664
        %p666 = pneg %p124
        %p667 = pneg %p121
        %s668 = smul.u32 2, %s42
        %p669 = scmp.lt.s32.totalorder %s41, 1
        %s670 = scalar_select %p669, %s41, 1
        %p671 = scmp.lt.s32.totalorder %s668, 1
        %s672 = scalar_select %p671, %s668, 1
        %s673 = smul.addr %s670, 2
        %s674 = sadd.s32 %s672, %s673
        %s675 = smul.addr %s674, 8
        %s676 = scalar_lea.vmem %s3, %s675
        %p677 = pneg %p152
        %p678 = pneg %p149
        %p679 = pneg %p173
        %p680 = pneg %p170
        %p681 = pneg %p194
        %p682 = pneg %p191
        %p683 = pneg %p215
        %p684 = pneg %p212
        %p685 = pneg %p236
        %p686 = pneg %p233
        %p687 = pneg %p257
        %p688 = pneg %p254
        %p689 = pneg %p278
        %p690 = pneg %p275
        %p691 = pneg %p299
        %p692 = pneg %p296
        %p693 = pneg %p320
        %p694 = pneg %p317
        %p695 = pneg %p341
        %p696 = pneg %p338
        %p697 = pneg %p362
        %p698 = pneg %p359
        %p699 = pneg %p383
        %p700 = pneg %p380
        %p701 = pneg %p404
        %p702 = pneg %p401
        %p703 = pneg %p425
        %p704 = pneg %p422
        %p705 = pneg %p453
        %p706 = pneg %p450
        %s707 = sand.u32 %s440, 1
        %s708 = scalar_lea.sflag [#allocation4], %s707
        %s709 = sand.u32 %s440, 1
        %s710 = smul.addr %s709, 16
        %s711 = scalar_lea.vmem [#allocation13], %s710
        %s712 = smul.u32 2, %s42
        %p713 = scmp.lt.s32.totalorder %s41, 1
        %s714 = scalar_select %p713, %s41, 1
        %p715 = scmp.lt.s32.totalorder %s712, 1
        %s716 = scalar_select %p715, %s712, 1
        %s717 = smul.addr %s714, 2
        %s718 = sadd.s32 %s716, %s717
        %s719 = smul.addr %s718, 8
        %s720 = scalar_lea.vmem %s0, %s719
        %s721 = smul.u32 2, %s42
        %p722 = scmp.lt.s32.totalorder %s41, 1
        %s723 = scalar_select %p722, %s41, 1
        %s724 = smul.addr %s723, 8
        %s725 = scalar_lea.vmem %s1, %s724
        %s726 = smul.u32 2, %s42
        %p727 = scmp.lt.s32.totalorder %s41, 1
        %s728 = scalar_select %p727, %s41, 1
        %p729 = scmp.lt.s32.totalorder %s726, 1
        %s730 = scalar_select %p729, %s726, 1
        %s731 = smul.addr %s728, 2
        %s732 = sadd.s32 %s730, %s731
        %s733 = smul.addr %s732, 8
        %s734 = scalar_lea.vmem %s3, %s733
        %s735 = smul.u32 2, %s42
        %s736 = smul.u32 2, %s42
        %v738 = vld [vmem:[%s720] sm:$0xff]
        %v739 = vld [vmem:[%s720 + $0x8] sm:$0xff]
        %v740 = vld [vmem:[%s725] sm:$0xff]
        %v741 = vld [vmem:[%s619] sm:$0xff]
        %vm742 = vcmask 23552
        %v744 = vsel %vm742, %v738, 0
        %v747 = vsel %vm742, %v739, 0
        %v750 = vsel %vm742, %v740, 0
        %752 = vmatprep.subr.mxu0 0.0
        %753 = vmatpush1.xpose.msra.mxu0 %v750
        %754 = vmatprep.subr.mxu0 0.0
        %755 = vmatpush1.xpose.msra.mxu0 0.0
        %756 = vmatprep.subr.mxu0 0.0
        %757 = vmatpush1.xpose.msra.mxu0 0.0
        %758 = vmatprep.subr.mxu0 0.0
        %759 = vmatpush1.xpose.msra.mxu0 0.0
        %760 = vmatprep.subr.mxu0 0.0
        %761 = vmatpush1.xpose.msra.mxu0 0.0
        %762 = vmatprep.subr.mxu0 0.0
        %763 = vmatpush1.xpose.msra.mxu0 0.0
        %764 = vmatprep.subr.mxu0 0.0
        %765 = vmatpush1.xpose.msra.mxu0 0.0
        %766 = vmatprep.subr.mxu0 0.0
        %767 = vmatpush1.xpose.msra.mxu0 0.0
        %768 = vmatprep.subr.mxu0 0.0
        %769 = vmatpush1.xpose.msra.mxu0 0.0
        %770 = vmatprep.subr.mxu0 0.0
        %771 = vmatpush1.xpose.msra.mxu0 0.0
        %772 = vmatprep.subr.mxu0 0.0
        %773 = vmatpush1.xpose.msra.mxu0 0.0
        %774 = vmatprep.subr.mxu0 0.0
        %775 = vmatpush1.xpose.msra.mxu0 0.0
        %776 = vmatprep.subr.mxu0 0.0
        %777 = vmatpush1.xpose.msra.mxu0 0.0
        %778 = vmatprep.subr.mxu0 0.0
        %779 = vmatpush1.xpose.msra.mxu0 0.0
        %780 = vmatprep.subr.mxu0 0.0
        %781 = vmatpush1.xpose.msra.mxu0 0.0
        %782 = vmatprep.subr.mxu0 0.0
        %783 = vmatpush1.xpose.msra.mxu0 0.0
        %784 = vmatprep.subr.mxu0 0.0
        %785 = vmatpush1.xpose.msra.mxu0 0.0
        %786 = vmatprep.subr.mxu0 0.0
        %787 = vmatpush1.xpose.msra.mxu0 0.0
        %788 = vmatprep.subr.mxu0 0.0
        %789 = vmatpush1.xpose.msra.mxu0 0.0
        %790 = vmatprep.subr.mxu0 0.0
        %791 = vmatpush1.xpose.msra.mxu0 0.0
        %792 = vmatprep.subr.mxu0 0.0
        %793 = vmatpush1.xpose.msra.mxu0 0.0
        %794 = vmatprep.subr.mxu0 0.0
        %795 = vmatpush1.xpose.msra.mxu0 0.0
        %796 = vmatprep.subr.mxu0 0.0
        %797 = vmatpush1.xpose.msra.mxu0 0.0
        %798 = vmatprep.subr.mxu0 0.0
        %799 = vmatpush1.xpose.msra.mxu0 0.0
        %800 = vmatprep.subr.mxu0 0.0
        %801 = vmatpush1.xpose.msra.mxu0 0.0
        %802 = vmatprep.subr.mxu0 0.0
        %803 = vmatpush1.xpose.msra.mxu0 0.0
        %804 = vmatprep.subr.mxu0 0.0
        %805 = vmatpush1.xpose.msra.mxu0 0.0
        %806 = vmatprep.subr.mxu0 0.0
        %807 = vmatpush1.xpose.msra.mxu0 0.0
        %808 = vmatprep.subr.mxu0 0.0
        %809 = vmatpush1.xpose.msra.mxu0 0.0
        %810 = vmatprep.subr.mxu0 0.0
        %811 = vmatpush1.xpose.msra.mxu0 0.0
        %812 = vmatprep.subr.mxu0 0.0
        %813 = vmatpush1.xpose.msra.mxu0 0.0
        %814 = vmatprep.subr.mxu0 0.0
        %815 = vmatpush1.xpose.msra.mxu0 0.0
        %816 = vmatprep.mubr.f32.mxu0 0.0
        %817 = vmatmul.mubr.f32.gmra.mrb[0].mxu0 %v744
        %v818 = vpop.f32.mrb[0].mxu0
        %v819 = vadd.f32 0.0, %v818
        %v820 = vpop.f32.mrb[0].mxu0
        %821 = vmatprep.mubr.f32.mxu0 0.0
        %822 = vmatmul.mubr.f32.gmra.mrb[0].mxu0 %v747
        %v823 = vpop.f32.mrb[0].mxu0
        %v824 = vadd.f32 0.0, %v823
        %v825 = vpop.f32.mrb[0].mxu0
        %826 = vdwg.mxu0
        %v827 = vmul.f32 %v819, -2.0
        %v828 = vmul.f32 %v824, -2.0
        %v829 = vmul.f32 %v738, %v738
        %v830 = vmul.f32 %v739, %v739
        %v831 = vsel %vm742, %v829, 0.0
        %832 = vadd.xlane.f32.xlu0 %v831
        %v833 = vpop.xlane.xlu0 %832
        %v834 = vsel %vm742, %v830, 0.0
        %835 = vadd.xlane.f32.xlu0 %v834
        %v836 = vpop.xlane.xlu0 %835
        %v837 = vadd.f32 %v827, %v833
        %v838 = vadd.f32 %v828, %v836
        %v839 = vmul.f32 %v740, %v740
        %v840 = vsel %vm742, %v839, 0.0
        %841 = vadd.xlane.f32.xlu0 %v840
        %v842 = vpop.xlane.xlu0 %841
        %v844 = vlaneseq
        %v845 = vand.u32 %v844, 127
        %v846 = vlaneseq
        %v847 = vshrl.u32 %v846, 7
        %v848 = vsub.s32 %v845, %v847
        %v849 = vrot.slane %v842, %v848
        %vm850 = vcmask 1042434
        %v851 = vsel %vm850, %v849, %v849
        %vm852 = vcmask 1043459
        %v853 = vsel %vm852, %v849, %v851
        %vm854 = vcmask 1044484
        %v855 = vsel %vm854, %v849, %v853
        %vm856 = vcmask 1045509
        %v857 = vsel %vm856, %v849, %v855
        %vm858 = vcmask 1046534
        %v859 = vsel %vm858, %v849, %v857
        %vm860 = vcmask 1047559
        %v861 = vsel %vm860, %v849, %v859
        %v863 = vadd.f32 %v837, %v861
        %v864 = vadd.f32 %v838, %v861
        %vm865 = vcmask 64512
        %v866 = vsel %vm865, %v863, inf
        %867 = vmin.xlane.f32.xlu0 %v866
        %v868 = vpop.xlane.xlu0 %867
        %v869 = vsel %vm865, %v864, inf
        %870 = vmin.xlane.f32.xlu0 %v869
        %v871 = vpop.xlane.xlu0 %870
        %vm872 = vcmp.eq.f32.partialorder %v863, %v868
        %vm873 = vcmp.eq.f32.partialorder %v864, %v871
        %v874 = vadd.f32 %v868, 1e-08
        %v875 = vadd.f32 %v871, 1e-08
        %v876 = vrcp.pop %v874
        %v877 = vrcp.pop %v875
        %v878 = vsel %vm872, %v876, 0.0
        %v879 = vsel %vm873, %v877, 0.0
        %v880 = vadd.f32 %v878, 0.0
        %v881 = vadd.f32 %v879, 0.0
        %v882 = vsel %vm872, 1e+30, %v863
        %v883 = vsel %vm873, 1e+30, %v864
        %v884 = vsel %vm865, %v882, inf
        %885 = vmin.xlane.f32.xlu0 %v884
        %v886 = vpop.xlane.xlu0 %885
        %v887 = vsel %vm865, %v883, inf
        %888 = vmin.xlane.f32.xlu0 %v887
        %v889 = vpop.xlane.xlu0 %888
        %vm890 = vcmp.eq.f32.partialorder %v882, %v886
        %vm891 = vcmp.eq.f32.partialorder %v883, %v889
        %v892 = vadd.f32 %v886, 1e-08
        %v893 = vadd.f32 %v889, 1e-08
        %v894 = vrcp.pop %v892
        %v895 = vrcp.pop %v893
        %v896 = vsel %vm890, %v894, 0.0
        %v897 = vsel %vm891, %v895, 0.0
        %v898 = vadd.f32 %v880, %v896
        %v899 = vadd.f32 %v881, %v897
        %v900 = vsel %vm890, 1e+30, %v882
        %v901 = vsel %vm891, 1e+30, %v883
        %v902 = vsel %vm865, %v900, inf
        %903 = vmin.xlane.f32.xlu0 %v902
        %v904 = vpop.xlane.xlu0 %903
        %v905 = vsel %vm865, %v901, inf
        %906 = vmin.xlane.f32.xlu0 %v905
        %v907 = vpop.xlane.xlu0 %906
        %vm908 = vcmp.eq.f32.partialorder %v900, %v904
        %vm909 = vcmp.eq.f32.partialorder %v901, %v907
        %v910 = vadd.f32 %v904, 1e-08
        %v911 = vadd.f32 %v907, 1e-08
        %v912 = vrcp.pop %v910
        %v913 = vrcp.pop %v911
        %v914 = vsel %vm908, %v912, 0.0
        %v915 = vsel %vm909, %v913, 0.0
        %v916 = vadd.f32 %v898, %v914
        %v917 = vadd.f32 %v899, %v915
        %v918 = vsel %vm865, %v916, 0.0
        %919 = vadd.xlane.f32.xlu0 %v918
        %v920 = vpop.xlane.xlu0 %919
        %v921 = vsel %vm865, %v917, 0.0
        %922 = vadd.xlane.f32.xlu0 %v921
        %v923 = vpop.xlane.xlu0 %922
        %v924 = vrcp.pop %v920
        %v925 = vrcp.pop %v923
        %v926 = vmul.f32 %v916, %v924
        %v927 = vmul.f32 %v917, %v925
        %v929 = vsel %vm865, %v926, 0
        %v932 = vsel %vm865, %v927, 0
        %934 = vmatprep.subr.mxu0 0.0
        %935 = vmatpush1.msra.mxu0 %v741
        %936 = vmatprep.subr.mxu0 0.0
        %937 = vmatpush1.msra.mxu0 0.0
        %938 = vmatprep.subr.mxu0 0.0
        %939 = vmatpush1.msra.mxu0 0.0
        %940 = vmatprep.subr.mxu0 0.0
        %941 = vmatpush1.msra.mxu0 0.0
        %942 = vmatprep.subr.mxu0 0.0
        %943 = vmatpush1.msra.mxu0 0.0
        %944 = vmatprep.subr.mxu0 0.0
        %945 = vmatpush1.msra.mxu0 0.0
        %946 = vmatprep.subr.mxu0 0.0
        %947 = vmatpush1.msra.mxu0 0.0
        %948 = vmatprep.subr.mxu0 0.0
        %949 = vmatpush1.msra.mxu0 0.0
        %950 = vmatprep.subr.mxu0 0.0
        %951 = vmatpush1.msra.mxu0 0.0
        %952 = vmatprep.subr.mxu0 0.0
        %953 = vmatpush1.msra.mxu0 0.0
        %954 = vmatprep.subr.mxu0 0.0
        %955 = vmatpush1.msra.mxu0 0.0
        %956 = vmatprep.subr.mxu0 0.0
        %957 = vmatpush1.msra.mxu0 0.0
        %958 = vmatprep.subr.mxu0 0.0
        %959 = vmatpush1.msra.mxu0 0.0
        %960 = vmatprep.subr.mxu0 0.0
        %961 = vmatpush1.msra.mxu0 0.0
        %962 = vmatprep.subr.mxu0 0.0
        %963 = vmatpush1.msra.mxu0 0.0
        %964 = vmatprep.subr.mxu0 0.0
        %965 = vmatpush1.msra.mxu0 0.0
        %966 = vmatprep.subr.mxu0 0.0
        %967 = vmatpush1.msra.mxu0 0.0
        %968 = vmatprep.subr.mxu0 0.0
        %969 = vmatpush1.msra.mxu0 0.0
        %970 = vmatprep.subr.mxu0 0.0
        %971 = vmatpush1.msra.mxu0 0.0
        %972 = vmatprep.subr.mxu0 0.0
        %973 = vmatpush1.msra.mxu0 0.0
        %974 = vmatprep.subr.mxu0 0.0
        %975 = vmatpush1.msra.mxu0 0.0
        %976 = vmatprep.subr.mxu0 0.0
        %977 = vmatpush1.msra.mxu0 0.0
        %978 = vmatprep.subr.mxu0 0.0
        %979 = vmatpush1.msra.mxu0 0.0
        %980 = vmatprep.subr.mxu0 0.0
        %981 = vmatpush1.msra.mxu0 0.0
        %982 = vmatprep.subr.mxu0 0.0
        %983 = vmatpush1.msra.mxu0 0.0
        %984 = vmatprep.subr.mxu0 0.0
        %985 = vmatpush1.msra.mxu0 0.0
        %986 = vmatprep.subr.mxu0 0.0
        %987 = vmatpush1.msra.mxu0 0.0
        %988 = vmatprep.subr.mxu0 0.0
        %989 = vmatpush1.msra.mxu0 0.0
        %990 = vmatprep.subr.mxu0 0.0
        %991 = vmatpush1.msra.mxu0 0.0
        %992 = vmatprep.subr.mxu0 0.0
        %993 = vmatpush1.msra.mxu0 0.0
        %994 = vmatprep.subr.mxu0 0.0
        %995 = vmatpush1.msra.mxu0 0.0
        %996 = vmatprep.subr.mxu0 0.0
        %997 = vmatpush1.msra.mxu0 0.0
        %998 = vmatprep.mubr.f32.mxu0 0.0
        %999 = vmatmul.mubr.f32.gmra.mrb[0].mxu0 %v929
        %v1000 = vpop.f32.mrb[0].mxu0
        %v1001 = vadd.f32 0.0, %v1000
        %v1002 = vpop.f32.mrb[0].mxu0
        %1003 = vmatprep.mubr.f32.mxu0 0.0
        %1004 = vmatmul.mubr.f32.gmra.mrb[0].mxu0 %v932
        %v1005 = vpop.f32.mrb[0].mxu0
        %v1006 = vadd.f32 0.0, %v1005
        %v1007 = vpop.f32.mrb[0].mxu0
        %1008 = vdwg.mxu0
        %v1009 = vpack.c.bf16 %v1006, %v1001
        %v1010 = vld [vmem:[#allocation7] sm:$0xf]
        %v1011 = vld [vmem:[%s734] sm:$0xff]
        %v1012 = vld [vmem:[%s734 + $0x8] sm:$0xff]
        %v1013 = vpack.c.bf16 %v1012, %v1011
        %v1014 = vld [vmem:[#allocation5] sm:$0xf]
        %v1016 = vsel %vm865, %v1013, 0
        %vm1018 = vcmask 1043456
        %v1020 = vsel %vm1018, %v1014, 0
        %1022 = vmatprep.subr.bf16.mxu0 0
        %1023 = vmatpush1.bf16.msra.mxu0 %v1020
        %1024 = vmatprep.subr.bf16.mxu0 0
        %1025 = vmatpush1.bf16.msra.mxu0 0
        %1026 = vmatprep.subr.bf16.mxu0 0
        %1027 = vmatpush1.bf16.msra.mxu0 0
        %1028 = vmatprep.subr.bf16.mxu0 0
        %1029 = vmatpush1.bf16.msra.mxu0 0
        %1030 = vmatprep.subr.bf16.mxu0 0
        %1031 = vmatpush1.bf16.msra.mxu0 0
        %1032 = vmatprep.subr.bf16.mxu0 0
        %1033 = vmatpush1.bf16.msra.mxu0 0
        %1034 = vmatprep.subr.bf16.mxu0 0
        %1035 = vmatpush1.bf16.msra.mxu0 0
        %1036 = vmatprep.subr.bf16.mxu0 0
        %1037 = vmatpush1.bf16.msra.mxu0 0
        %1038 = vmatprep.subr.bf16.mxu0 0
        %1039 = vmatpush1.bf16.msra.mxu0 0
        %1040 = vmatprep.subr.bf16.mxu0 0
        %1041 = vmatpush1.bf16.msra.mxu0 0
        %1042 = vmatprep.subr.bf16.mxu0 0
        %1043 = vmatpush1.bf16.msra.mxu0 0
        %1044 = vmatprep.subr.bf16.mxu0 0
        %1045 = vmatpush1.bf16.msra.mxu0 0
        %1046 = vmatprep.subr.bf16.mxu0 0
        %1047 = vmatpush1.bf16.msra.mxu0 0
        %1048 = vmatprep.subr.bf16.mxu0 0
        %1049 = vmatpush1.bf16.msra.mxu0 0
        %1050 = vmatprep.subr.bf16.mxu0 0
        %1051 = vmatpush1.bf16.msra.mxu0 0
        %1052 = vmatprep.subr.bf16.mxu0 0
        %1053 = vmatpush1.bf16.msra.mxu0 0
        %1054 = vmatprep.mubr.bf16.mxu0 0
        %1055 = vmatmul.mubr.bf16.gmra.mrb[0].mxu0 %v1016
        %v1056 = vpop.f32.mrb[0].mxu0
        %v1057 = vadd.f32 0.0, %v1056
        %v1058 = vpop.f32.mrb[0].mxu0
        %v1059 = vpop.f32.mrb[0].mxu0
        %v1060 = vadd.f32 0.0, %v1059
        %v1061 = vpop.f32.mrb[0].mxu0
        %1062 = vdwg.mxu0
        %v1064 = vsel %vm865, %v1009, 0
        %v1067 = vsel %vm1018, %v1010, 0
        %1069 = vmatprep.subr.bf16.mxu0 0
        %1070 = vmatpush1.bf16.msra.mxu0 %v1067
        %1071 = vmatprep.subr.bf16.mxu0 0
        %1072 = vmatpush1.bf16.msra.mxu0 0
        %1073 = vmatprep.subr.bf16.mxu0 0
        %1074 = vmatpush1.bf16.msra.mxu0 0
        %1075 = vmatprep.subr.bf16.mxu0 0
        %1076 = vmatpush1.bf16.msra.mxu0 0
        %1077 = vmatprep.subr.bf16.mxu0 0
        %1078 = vmatpush1.bf16.msra.mxu0 0
        %1079 = vmatprep.subr.bf16.mxu0 0
        %1080 = vmatpush1.bf16.msra.mxu0 0
        %1081 = vmatprep.subr.bf16.mxu0 0
        %1082 = vmatpush1.bf16.msra.mxu0 0
        %1083 = vmatprep.subr.bf16.mxu0 0
        %1084 = vmatpush1.bf16.msra.mxu0 0
        %1085 = vmatprep.subr.bf16.mxu0 0
        %1086 = vmatpush1.bf16.msra.mxu0 0
        %1087 = vmatprep.subr.bf16.mxu0 0
        %1088 = vmatpush1.bf16.msra.mxu0 0
        %1089 = vmatprep.subr.bf16.mxu0 0
        %1090 = vmatpush1.bf16.msra.mxu0 0
        %1091 = vmatprep.subr.bf16.mxu0 0
        %1092 = vmatpush1.bf16.msra.mxu0 0
        %1093 = vmatprep.subr.bf16.mxu0 0
        %1094 = vmatpush1.bf16.msra.mxu0 0
        %1095 = vmatprep.subr.bf16.mxu0 0
        %1096 = vmatpush1.bf16.msra.mxu0 0
        %1097 = vmatprep.subr.bf16.mxu0 0
        %1098 = vmatpush1.bf16.msra.mxu0 0
        %1099 = vmatprep.subr.bf16.mxu0 0
        %1100 = vmatpush1.bf16.msra.mxu0 0
        %1101 = vmatprep.mubr.bf16.mxu0 0
        %1102 = vmatmul.mubr.bf16.gmra.mrb[0].mxu0 %v1064
        %v1103 = vpop.f32.mrb[0].mxu0
        %v1104 = vadd.f32 %v1057, %v1103
        %v1105 = vpop.f32.mrb[0].mxu0
        %v1106 = vpop.f32.mrb[0].mxu0
        %v1107 = vadd.f32 %v1060, %v1106
        %v1108 = vpop.f32.mrb[0].mxu0
        %1109 = vdwg.mxu0
        %v1110 = vld [vmem:[%s6] sm:$0x1]
        %v1112 = vlaneseq
        %v1113 = vshrl.u32 %v1112, 7
        %v1114 = vsub.s32 0, %v1113
        %v1115 = vrot.slane %v1110, %v1114
        %v1117 = vadd.f32 %v1104, %v1115
        %v1118 = vadd.f32 %v1107, %v1115
        %v1119 = vmax.f32 %v1117, 0.0
        %v1120 = vmax.f32 %v1118, 0.0
        %v1121 = vpack.c.bf16 %v1120, %v1119
        %v1122 = vld [vmem:[%s7] sm:$0xf]
        %v1123 = vld [vmem:[%s7 + $0x4] sm:$0xf]
        %v1124 = vld [vmem:[%s7 + $0x8] sm:$0xf]
        %v1125 = vld [vmem:[%s7 + $0xc] sm:$0xf]
        %v1126 = vld [vmem:[%s7 + $0x10] sm:$0xf]
        %v1127 = vld [vmem:[%s7 + $0x14] sm:$0xf]
        %v1128 = vld [vmem:[%s7 + $0x18] sm:$0xf]
        %v1129 = vld [vmem:[%s7 + $0x1c] sm:$0xf]
        %v1130 = vld [vmem:[%s7 + $0x20] sm:$0xf]
        %v1131 = vld [vmem:[%s7 + $0x24] sm:$0xf]
        %v1132 = vld [vmem:[%s7 + $0x28] sm:$0xf]
        %v1133 = vld [vmem:[%s7 + $0x2c] sm:$0xf]
        %v1134 = vld [vmem:[%s7 + $0x30] sm:$0xf]
        %v1135 = vld [vmem:[%s7 + $0x34] sm:$0xf]
        %v1136 = vld [vmem:[%s7 + $0x38] sm:$0xf]
        %v1137 = vld [vmem:[%s7 + $0x3c] sm:$0xf]
        %v1138 = vld [vmem:[%s8] sm:$0x1]
        %v1140 = vlaneseq
        %v1141 = vshrl.u32 %v1140, 7
        %v1142 = vsub.s32 0, %v1141
        %v1143 = vrot.slane %v1138, %v1142
        %v1161 = vunpack.c.l.b16 %v1122
        %v1162 = vunpack.c.l.b16 %v1123
        %v1163 = vunpack.c.l.b16 %v1124
        %v1164 = vunpack.c.l.b16 %v1125
        %v1165 = vunpack.c.l.b16 %v1126
        %v1166 = vunpack.c.l.b16 %v1127
        %v1167 = vunpack.c.l.b16 %v1128
        %v1168 = vunpack.c.l.b16 %v1129
        %v1169 = vunpack.c.l.b16 %v1130
        %v1170 = vunpack.c.l.b16 %v1131
        %v1171 = vunpack.c.l.b16 %v1132
        %v1172 = vunpack.c.l.b16 %v1133
        %v1173 = vunpack.c.l.b16 %v1134
        %v1174 = vunpack.c.l.b16 %v1135
        %v1175 = vunpack.c.l.b16 %v1136
        %v1176 = vunpack.c.l.b16 %v1137
        %v1177 = vpack.c.b16 %v1162, %v1161
        %v1178 = vpack.c.b16 %v1164, %v1163
        %v1179 = vpack.c.b16 %v1166, %v1165
        %v1180 = vpack.c.b16 %v1168, %v1167
        %v1181 = vpack.c.b16 %v1170, %v1169
        %v1182 = vpack.c.b16 %v1172, %v1171
        %v1183 = vpack.c.b16 %v1174, %v1173
        %v1184 = vpack.c.b16 %v1176, %v1175
        %1193 = vmatprep.subr.bf16.mxu0 0
        %1194 = vmatpush1.bf16.msra.mxu0 %v1177
        %1195 = vmatprep.subr.bf16.mxu0 0
        %1196 = vmatpush1.bf16.msra.mxu0 %v1178
        %1197 = vmatprep.subr.bf16.mxu0 0
        %1198 = vmatpush1.bf16.msra.mxu0 %v1179
        %1199 = vmatprep.subr.bf16.mxu0 0
        %1200 = vmatpush1.bf16.msra.mxu0 %v1180
        %1201 = vmatprep.subr.bf16.mxu0 0
        %1202 = vmatpush1.bf16.msra.mxu0 %v1181
        %1203 = vmatprep.subr.bf16.mxu0 0
        %1204 = vmatpush1.bf16.msra.mxu0 %v1182
        %1205 = vmatprep.subr.bf16.mxu0 0
        %1206 = vmatpush1.bf16.msra.mxu0 %v1183
        %1207 = vmatprep.subr.bf16.mxu0 0
        %1208 = vmatpush1.bf16.msra.mxu0 %v1184
        %1209 = vmatprep.subr.bf16.mxu0 0
        %1210 = vmatpush1.bf16.msra.mxu0 0
        %1211 = vmatprep.subr.bf16.mxu0 0
        %1212 = vmatpush1.bf16.msra.mxu0 0
        %1213 = vmatprep.subr.bf16.mxu0 0
        %1214 = vmatpush1.bf16.msra.mxu0 0
        %1215 = vmatprep.subr.bf16.mxu0 0
        %1216 = vmatpush1.bf16.msra.mxu0 0
        %1217 = vmatprep.subr.bf16.mxu0 0
        %1218 = vmatpush1.bf16.msra.mxu0 0
        %1219 = vmatprep.subr.bf16.mxu0 0
        %1220 = vmatpush1.bf16.msra.mxu0 0
        %1221 = vmatprep.subr.bf16.mxu0 0
        %1222 = vmatpush1.bf16.msra.mxu0 0
        %1223 = vmatprep.subr.bf16.mxu0 0
        %1224 = vmatpush1.bf16.msra.mxu0 0
        %1225 = vmatprep.mubr.bf16.mxu0 0
        %1226 = vmatmul.mubr.bf16.gmra.mrb[0].mxu0 %v1121
        %v1227 = vpop.f32.mrb[0].mxu0
        %v1228 = vadd.f32 %v1143, %v1227
        %v1229 = vpop.f32.mrb[0].mxu0
        %v1230 = vpop.f32.mrb[0].mxu0
        %v1231 = vadd.f32 %v1143, %v1230
        %v1232 = vpop.f32.mrb[0].mxu0
        %1233 = vdwg.mxu0
        %v1234 = vpack.c.bf16 %v1231, %v1228
        %v1235 = vld [vmem:[%s9] sm:$0xf]
        %v1236 = vld [vmem:[%s9 + $0x4] sm:$0xf]
        %v1237 = vld [vmem:[%s9 + $0x8] sm:$0xf]
        %v1238 = vld [vmem:[%s9 + $0xc] sm:$0xf]
        %v1239 = vld [vmem:[%s9 + $0x10] sm:$0xf]
        %v1240 = vld [vmem:[%s9 + $0x14] sm:$0xf]
        %v1241 = vld [vmem:[%s9 + $0x18] sm:$0xf]
        %v1242 = vld [vmem:[%s9 + $0x1c] sm:$0xf]
        %v1243 = vld [vmem:[%s9 + $0x20] sm:$0xf]
        %v1244 = vld [vmem:[%s9 + $0x24] sm:$0xf]
        %v1245 = vld [vmem:[%s9 + $0x28] sm:$0xf]
        %v1246 = vld [vmem:[%s9 + $0x2c] sm:$0xf]
        %v1247 = vld [vmem:[%s9 + $0x30] sm:$0xf]
        %v1248 = vld [vmem:[%s9 + $0x34] sm:$0xf]
        %v1249 = vld [vmem:[%s9 + $0x38] sm:$0xf]
        %v1250 = vld [vmem:[%s9 + $0x3c] sm:$0xf]
        %v1251 = vld [vmem:[%s10] sm:$0x1]
        %v1253 = vlaneseq
        %v1254 = vshrl.u32 %v1253, 7
        %v1255 = vsub.s32 0, %v1254
        %v1256 = vrot.slane %v1251, %v1255
        %v1274 = vunpack.c.l.b16 %v1235
        %v1275 = vunpack.c.l.b16 %v1236
        %v1276 = vunpack.c.l.b16 %v1237
        %v1277 = vunpack.c.l.b16 %v1238
        %v1278 = vunpack.c.l.b16 %v1239
        %v1279 = vunpack.c.l.b16 %v1240
        %v1280 = vunpack.c.l.b16 %v1241
        %v1281 = vunpack.c.l.b16 %v1242
        %v1282 = vunpack.c.l.b16 %v1243
        %v1283 = vunpack.c.l.b16 %v1244
        %v1284 = vunpack.c.l.b16 %v1245
        %v1285 = vunpack.c.l.b16 %v1246
        %v1286 = vunpack.c.l.b16 %v1247
        %v1287 = vunpack.c.l.b16 %v1248
        %v1288 = vunpack.c.l.b16 %v1249
        %v1289 = vunpack.c.l.b16 %v1250
        %v1290 = vpack.c.b16 %v1275, %v1274
        %v1291 = vpack.c.b16 %v1277, %v1276
        %v1292 = vpack.c.b16 %v1279, %v1278
        %v1293 = vpack.c.b16 %v1281, %v1280
        %v1294 = vpack.c.b16 %v1283, %v1282
        %v1295 = vpack.c.b16 %v1285, %v1284
        %v1296 = vpack.c.b16 %v1287, %v1286
        %v1297 = vpack.c.b16 %v1289, %v1288
        %1306 = vmatprep.subr.bf16.mxu0 0
        %1307 = vmatpush1.bf16.msra.mxu0 %v1290
        %1308 = vmatprep.subr.bf16.mxu0 0
        %1309 = vmatpush1.bf16.msra.mxu0 %v1291
        %1310 = vmatprep.subr.bf16.mxu0 0
        %1311 = vmatpush1.bf16.msra.mxu0 %v1292
        %1312 = vmatprep.subr.bf16.mxu0 0
        %1313 = vmatpush1.bf16.msra.mxu0 %v1293
        %1314 = vmatprep.subr.bf16.mxu0 0
        %1315 = vmatpush1.bf16.msra.mxu0 %v1294
        %1316 = vmatprep.subr.bf16.mxu0 0
        %1317 = vmatpush1.bf16.msra.mxu0 %v1295
        %1318 = vmatprep.subr.bf16.mxu0 0
        %1319 = vmatpush1.bf16.msra.mxu0 %v1296
        %1320 = vmatprep.subr.bf16.mxu0 0
        %1321 = vmatpush1.bf16.msra.mxu0 %v1297
        %1322 = vmatprep.subr.bf16.mxu0 0
        %1323 = vmatpush1.bf16.msra.mxu0 0
        %1324 = vmatprep.subr.bf16.mxu0 0
        %1325 = vmatpush1.bf16.msra.mxu0 0
        %1326 = vmatprep.subr.bf16.mxu0 0
        %1327 = vmatpush1.bf16.msra.mxu0 0
        %1328 = vmatprep.subr.bf16.mxu0 0
        %1329 = vmatpush1.bf16.msra.mxu0 0
        %1330 = vmatprep.subr.bf16.mxu0 0
        %1331 = vmatpush1.bf16.msra.mxu0 0
        %1332 = vmatprep.subr.bf16.mxu0 0
        %1333 = vmatpush1.bf16.msra.mxu0 0
        %1334 = vmatprep.subr.bf16.mxu0 0
        %1335 = vmatpush1.bf16.msra.mxu0 0
        %1336 = vmatprep.subr.bf16.mxu0 0
        %1337 = vmatpush1.bf16.msra.mxu0 0
        %1338 = vmatprep.mubr.bf16.mxu0 0
        %1339 = vmatmul.mubr.bf16.gmra.mrb[0].mxu0 %v1234
        %v1340 = vpop.f32.mrb[0].mxu0
        %v1341 = vadd.f32 %v1256, %v1340
        %v1342 = vpop.f32.mrb[0].mxu0
        %v1343 = vpop.f32.mrb[0].mxu0
        %v1344 = vadd.f32 %v1256, %v1343
        %v1345 = vpop.f32.mrb[0].mxu0
        %1346 = vdwg.mxu0
        %v1347 = vmax.f32 %v1341, 0.0
        %v1348 = vmax.f32 %v1344, 0.0
        %v1349 = vpack.c.bf16 %v1348, %v1347
        %v1350 = vld [vmem:[#allocation8] sm:$0xf]
        %v1351 = vld [vmem:[#allocation8 + $0x4] sm:$0xf]
        %v1352 = vld [vmem:[#allocation8 + $0x8] sm:$0xf]
        %v1353 = vld [vmem:[#allocation8 + $0xc] sm:$0xf]
        %v1354 = vld [vmem:[#allocation8 + $0x10] sm:$0xf]
        %v1355 = vld [vmem:[#allocation8 + $0x14] sm:$0xf]
        %v1356 = vld [vmem:[#allocation8 + $0x18] sm:$0xf]
        %v1357 = vld [vmem:[#allocation8 + $0x1c] sm:$0xf]
        %v1358 = vld [vmem:[#allocation8 + $0x20] sm:$0xf]
        %v1359 = vld [vmem:[#allocation8 + $0x24] sm:$0xf]
        %v1360 = vld [vmem:[#allocation8 + $0x28] sm:$0xf]
        %v1361 = vld [vmem:[#allocation8 + $0x2c] sm:$0xf]
        %v1362 = vld [vmem:[#allocation8 + $0x30] sm:$0xf]
        %v1363 = vld [vmem:[#allocation8 + $0x34] sm:$0xf]
        %v1364 = vld [vmem:[#allocation8 + $0x38] sm:$0xf]
        %v1365 = vld [vmem:[#allocation8 + $0x3c] sm:$0xf]
        %v1366 = vld [vmem:[%s12] sm:$0x1]
        %v1368 = vlaneseq
        %v1369 = vshrl.u32 %v1368, 7
        %v1370 = vsub.s32 0, %v1369
        %v1371 = vrot.slane %v1366, %v1370
        %v1389 = vunpack.c.l.b16 %v1350
        %v1390 = vunpack.c.l.b16 %v1351
        %v1391 = vunpack.c.l.b16 %v1352
        %v1392 = vunpack.c.l.b16 %v1353
        %v1393 = vunpack.c.l.b16 %v1354
        %v1394 = vunpack.c.l.b16 %v1355
        %v1395 = vunpack.c.l.b16 %v1356
        %v1396 = vunpack.c.l.b16 %v1357
        %v1397 = vunpack.c.l.b16 %v1358
        %v1398 = vunpack.c.l.b16 %v1359
        %v1399 = vunpack.c.l.b16 %v1360
        %v1400 = vunpack.c.l.b16 %v1361
        %v1401 = vunpack.c.l.b16 %v1362
        %v1402 = vunpack.c.l.b16 %v1363
        %v1403 = vunpack.c.l.b16 %v1364
        %v1404 = vunpack.c.l.b16 %v1365
        %v1405 = vpack.c.b16 %v1390, %v1389
        %v1406 = vpack.c.b16 %v1392, %v1391
        %v1407 = vpack.c.b16 %v1394, %v1393
        %v1408 = vpack.c.b16 %v1396, %v1395
        %v1409 = vpack.c.b16 %v1398, %v1397
        %v1410 = vpack.c.b16 %v1400, %v1399
        %v1411 = vpack.c.b16 %v1402, %v1401
        %v1412 = vpack.c.b16 %v1404, %v1403
        %1421 = vmatprep.subr.bf16.mxu0 0
        %1422 = vmatpush1.bf16.msra.mxu0 %v1405
        %1423 = vmatprep.subr.bf16.mxu0 0
        %1424 = vmatpush1.bf16.msra.mxu0 %v1406
        %1425 = vmatprep.subr.bf16.mxu0 0
        %1426 = vmatpush1.bf16.msra.mxu0 %v1407
        %1427 = vmatprep.subr.bf16.mxu0 0
        %1428 = vmatpush1.bf16.msra.mxu0 %v1408
        %1429 = vmatprep.subr.bf16.mxu0 0
        %1430 = vmatpush1.bf16.msra.mxu0 %v1409
        %1431 = vmatprep.subr.bf16.mxu0 0
        %1432 = vmatpush1.bf16.msra.mxu0 %v1410
        %1433 = vmatprep.subr.bf16.mxu0 0
        %1434 = vmatpush1.bf16.msra.mxu0 %v1411
        %1435 = vmatprep.subr.bf16.mxu0 0
        %1436 = vmatpush1.bf16.msra.mxu0 %v1412
        %1437 = vmatprep.subr.bf16.mxu0 0
        %1438 = vmatpush1.bf16.msra.mxu0 0
        %1439 = vmatprep.subr.bf16.mxu0 0
        %1440 = vmatpush1.bf16.msra.mxu0 0
        %1441 = vmatprep.subr.bf16.mxu0 0
        %1442 = vmatpush1.bf16.msra.mxu0 0
        %1443 = vmatprep.subr.bf16.mxu0 0
        %1444 = vmatpush1.bf16.msra.mxu0 0
        %1445 = vmatprep.subr.bf16.mxu0 0
        %1446 = vmatpush1.bf16.msra.mxu0 0
        %1447 = vmatprep.subr.bf16.mxu0 0
        %1448 = vmatpush1.bf16.msra.mxu0 0
        %1449 = vmatprep.subr.bf16.mxu0 0
        %1450 = vmatpush1.bf16.msra.mxu0 0
        %1451 = vmatprep.subr.bf16.mxu0 0
        %1452 = vmatpush1.bf16.msra.mxu0 0
        %1453 = vmatprep.mubr.bf16.mxu0 0
        %1454 = vmatmul.mubr.bf16.gmra.mrb[0].mxu0 %v1349
        %v1455 = vpop.f32.mrb[0].mxu0
        %v1456 = vadd.f32 %v1371, %v1455
        %v1457 = vpop.f32.mrb[0].mxu0
        %v1458 = vpop.f32.mrb[0].mxu0
        %v1459 = vadd.f32 %v1371, %v1458
        %v1460 = vpop.f32.mrb[0].mxu0
        %1461 = vdwg.mxu0
        %v1462 = vpack.c.bf16 %v1459, %v1456
        %v1463 = vld [vmem:[#allocation10] sm:$0xf]
        %v1464 = vld [vmem:[#allocation10 + $0x4] sm:$0xf]
        %v1465 = vld [vmem:[#allocation10 + $0x8] sm:$0xf]
        %v1466 = vld [vmem:[#allocation10 + $0xc] sm:$0xf]
        %v1467 = vld [vmem:[#allocation10 + $0x10] sm:$0xf]
        %v1468 = vld [vmem:[#allocation10 + $0x14] sm:$0xf]
        %v1469 = vld [vmem:[#allocation10 + $0x18] sm:$0xf]
        %v1470 = vld [vmem:[#allocation10 + $0x1c] sm:$0xf]
        %v1471 = vld [vmem:[#allocation10 + $0x20] sm:$0xf]
        %v1472 = vld [vmem:[#allocation10 + $0x24] sm:$0xf]
        %v1473 = vld [vmem:[#allocation10 + $0x28] sm:$0xf]
        %v1474 = vld [vmem:[#allocation10 + $0x2c] sm:$0xf]
        %v1475 = vld [vmem:[#allocation10 + $0x30] sm:$0xf]
        %v1476 = vld [vmem:[#allocation10 + $0x34] sm:$0xf]
        %v1477 = vld [vmem:[#allocation10 + $0x38] sm:$0xf]
        %v1478 = vld [vmem:[#allocation10 + $0x3c] sm:$0xf]
        %v1479 = vld [vmem:[%s14] sm:$0x1]
        %v1481 = vlaneseq
        %v1482 = vshrl.u32 %v1481, 7
        %v1483 = vsub.s32 0, %v1482
        %v1484 = vrot.slane %v1479, %v1483
        %v1502 = vunpack.c.l.b16 %v1463
        %v1503 = vunpack.c.l.b16 %v1464
        %v1504 = vunpack.c.l.b16 %v1465
        %v1505 = vunpack.c.l.b16 %v1466
        %v1506 = vunpack.c.l.b16 %v1467
        %v1507 = vunpack.c.l.b16 %v1468
        %v1508 = vunpack.c.l.b16 %v1469
        %v1509 = vunpack.c.l.b16 %v1470
        %v1510 = vunpack.c.l.b16 %v1471
        %v1511 = vunpack.c.l.b16 %v1472
        %v1512 = vunpack.c.l.b16 %v1473
        %v1513 = vunpack.c.l.b16 %v1474
        %v1514 = vunpack.c.l.b16 %v1475
        %v1515 = vunpack.c.l.b16 %v1476
        %v1516 = vunpack.c.l.b16 %v1477
        %v1517 = vunpack.c.l.b16 %v1478
        %v1518 = vpack.c.b16 %v1503, %v1502
        %v1519 = vpack.c.b16 %v1505, %v1504
        %v1520 = vpack.c.b16 %v1507, %v1506
        %v1521 = vpack.c.b16 %v1509, %v1508
        %v1522 = vpack.c.b16 %v1511, %v1510
        %v1523 = vpack.c.b16 %v1513, %v1512
        %v1524 = vpack.c.b16 %v1515, %v1514
        %v1525 = vpack.c.b16 %v1517, %v1516
        %1534 = vmatprep.subr.bf16.mxu0 0
        %1535 = vmatpush1.bf16.msra.mxu0 %v1518
        %1536 = vmatprep.subr.bf16.mxu0 0
        %1537 = vmatpush1.bf16.msra.mxu0 %v1519
        %1538 = vmatprep.subr.bf16.mxu0 0
        %1539 = vmatpush1.bf16.msra.mxu0 %v1520
        %1540 = vmatprep.subr.bf16.mxu0 0
        %1541 = vmatpush1.bf16.msra.mxu0 %v1521
        %1542 = vmatprep.subr.bf16.mxu0 0
        %1543 = vmatpush1.bf16.msra.mxu0 %v1522
        %1544 = vmatprep.subr.bf16.mxu0 0
        %1545 = vmatpush1.bf16.msra.mxu0 %v1523
        %1546 = vmatprep.subr.bf16.mxu0 0
        %1547 = vmatpush1.bf16.msra.mxu0 %v1524
        %1548 = vmatprep.subr.bf16.mxu0 0
        %1549 = vmatpush1.bf16.msra.mxu0 %v1525
        %1550 = vmatprep.subr.bf16.mxu0 0
        %1551 = vmatpush1.bf16.msra.mxu0 0
        %1552 = vmatprep.subr.bf16.mxu0 0
        %1553 = vmatpush1.bf16.msra.mxu0 0
        %1554 = vmatprep.subr.bf16.mxu0 0
        %1555 = vmatpush1.bf16.msra.mxu0 0
        %1556 = vmatprep.subr.bf16.mxu0 0
        %1557 = vmatpush1.bf16.msra.mxu0 0
        %1558 = vmatprep.subr.bf16.mxu0 0
        %1559 = vmatpush1.bf16.msra.mxu0 0
        %1560 = vmatprep.subr.bf16.mxu0 0
        %1561 = vmatpush1.bf16.msra.mxu0 0
        %1562 = vmatprep.subr.bf16.mxu0 0
        %1563 = vmatpush1.bf16.msra.mxu0 0
        %1564 = vmatprep.subr.bf16.mxu0 0
        %1565 = vmatpush1.bf16.msra.mxu0 0
        %1566 = vmatprep.mubr.bf16.mxu0 0
        %1567 = vmatmul.mubr.bf16.gmra.mrb[0].mxu0 %v1462
        %v1568 = vpop.f32.mrb[0].mxu0
        %v1569 = vadd.f32 %v1484, %v1568
        %v1570 = vpop.f32.mrb[0].mxu0
        %v1571 = vpop.f32.mrb[0].mxu0
        %v1572 = vadd.f32 %v1484, %v1571
        %v1573 = vpop.f32.mrb[0].mxu0
        %1574 = vdwg.mxu0
        %v1575 = vmax.f32 %v1569, 0.0
        %v1576 = vmax.f32 %v1572, 0.0
        %v1577 = vpack.c.bf16 %v1576, %v1575
        %v1578 = vld [vmem:[#allocation11] sm:$0xf]
        %v1579 = vld [vmem:[#allocation11 + $0x4] sm:$0xf]
        %v1580 = vld [vmem:[#allocation11 + $0x8] sm:$0xf]
        %v1581 = vld [vmem:[#allocation11 + $0xc] sm:$0xf]
        %v1582 = vld [vmem:[#allocation11 + $0x10] sm:$0xf]
        %v1583 = vld [vmem:[#allocation11 + $0x14] sm:$0xf]
        %v1584 = vld [vmem:[#allocation11 + $0x18] sm:$0xf]
        %v1585 = vld [vmem:[#allocation11 + $0x1c] sm:$0xf]
        %v1586 = vld [vmem:[#allocation11 + $0x20] sm:$0xf]
        %v1587 = vld [vmem:[#allocation11 + $0x24] sm:$0xf]
        %v1588 = vld [vmem:[#allocation11 + $0x28] sm:$0xf]
        %v1589 = vld [vmem:[#allocation11 + $0x2c] sm:$0xf]
        %v1590 = vld [vmem:[#allocation11 + $0x30] sm:$0xf]
        %v1591 = vld [vmem:[#allocation11 + $0x34] sm:$0xf]
        %v1592 = vld [vmem:[#allocation11 + $0x38] sm:$0xf]
        %v1593 = vld [vmem:[#allocation11 + $0x3c] sm:$0xf]
        %v1594 = vld [vmem:[%s16] sm:$0x1]
        %v1596 = vlaneseq
        %v1597 = vshrl.u32 %v1596, 7
        %v1598 = vsub.s32 0, %v1597
        %v1599 = vrot.slane %v1594, %v1598
        %v1617 = vunpack.c.l.b16 %v1578
        %v1618 = vunpack.c.l.b16 %v1579
        %v1619 = vunpack.c.l.b16 %v1580
        %v1620 = vunpack.c.l.b16 %v1581
        %v1621 = vunpack.c.l.b16 %v1582
        %v1622 = vunpack.c.l.b16 %v1583
        %v1623 = vunpack.c.l.b16 %v1584
        %v1624 = vunpack.c.l.b16 %v1585
        %v1625 = vunpack.c.l.b16 %v1586
        %v1626 = vunpack.c.l.b16 %v1587
        %v1627 = vunpack.c.l.b16 %v1588
        %v1628 = vunpack.c.l.b16 %v1589
        %v1629 = vunpack.c.l.b16 %v1590
        %v1630 = vunpack.c.l.b16 %v1591
        %v1631 = vunpack.c.l.b16 %v1592
        %v1632 = vunpack.c.l.b16 %v1593
        %v1633 = vpack.c.b16 %v1618, %v1617
        %v1634 = vpack.c.b16 %v1620, %v1619
        %v1635 = vpack.c.b16 %v1622, %v1621
        %v1636 = vpack.c.b16 %v1624, %v1623
        %v1637 = vpack.c.b16 %v1626, %v1625
        %v1638 = vpack.c.b16 %v1628, %v1627
        %v1639 = vpack.c.b16 %v1630, %v1629
        %v1640 = vpack.c.b16 %v1632, %v1631
        %1649 = vmatprep.subr.bf16.mxu0 0
        %1650 = vmatpush1.bf16.msra.mxu0 %v1633
        %1651 = vmatprep.subr.bf16.mxu0 0
        %1652 = vmatpush1.bf16.msra.mxu0 %v1634
        %1653 = vmatprep.subr.bf16.mxu0 0
        %1654 = vmatpush1.bf16.msra.mxu0 %v1635
        %1655 = vmatprep.subr.bf16.mxu0 0
        %1656 = vmatpush1.bf16.msra.mxu0 %v1636
        %1657 = vmatprep.subr.bf16.mxu0 0
        %1658 = vmatpush1.bf16.msra.mxu0 %v1637
        %1659 = vmatprep.subr.bf16.mxu0 0
        %1660 = vmatpush1.bf16.msra.mxu0 %v1638
        %1661 = vmatprep.subr.bf16.mxu0 0
        %1662 = vmatpush1.bf16.msra.mxu0 %v1639
        %1663 = vmatprep.subr.bf16.mxu0 0
        %1664 = vmatpush1.bf16.msra.mxu0 %v1640
        %1665 = vmatprep.subr.bf16.mxu0 0
        %1666 = vmatpush1.bf16.msra.mxu0 0
        %1667 = vmatprep.subr.bf16.mxu0 0
        %1668 = vmatpush1.bf16.msra.mxu0 0
        %1669 = vmatprep.subr.bf16.mxu0 0
        %1670 = vmatpush1.bf16.msra.mxu0 0
        %1671 = vmatprep.subr.bf16.mxu0 0
        %1672 = vmatpush1.bf16.msra.mxu0 0
        %1673 = vmatprep.subr.bf16.mxu0 0
        %1674 = vmatpush1.bf16.msra.mxu0 0
        %1675 = vmatprep.subr.bf16.mxu0 0
        %1676 = vmatpush1.bf16.msra.mxu0 0
        %1677 = vmatprep.subr.bf16.mxu0 0
        %1678 = vmatpush1.bf16.msra.mxu0 0
        %1679 = vmatprep.subr.bf16.mxu0 0
        %1680 = vmatpush1.bf16.msra.mxu0 0
        %1681 = vmatprep.mubr.bf16.mxu0 0
        %1682 = vmatmul.mubr.bf16.gmra.mrb[0].mxu0 %v1577
        %v1683 = vpop.f32.mrb[0].mxu0
        %v1684 = vadd.f32 %v1599, %v1683
        %v1685 = vpop.f32.mrb[0].mxu0
        %v1686 = vpop.f32.mrb[0].mxu0
        %v1687 = vadd.f32 %v1599, %v1686
        %v1688 = vpop.f32.mrb[0].mxu0
        %1689 = vdwg.mxu0
        %v1690 = vmax.f32 %v1684, 0.0
        %v1691 = vmax.f32 %v1687, 0.0
        %v1692 = vadd.f32 %v1690, %v1456
        %v1693 = vadd.f32 %v1691, %v1459
        %v1694 = vmax.f32 %v1692, 0.0
        %v1695 = vmax.f32 %v1693, 0.0
        %1696 = vst [vmem:[%s711] sm:$0xff] %v1694
        %1697 = vst [vmem:[%s711 + $0x8] sm:$0xff] %v1695
        %s1698 = sand.u32 %s440, 1
        %s1699 = scalar_lea.sflag [#allocation4], %s1698
        %s1700 = sand.u32 %s440, 1
        %s1701 = smul.addr %s1700, 16
        %s1702 = scalar_lea.vmem [#allocation13], %s1701
        // Predicated region
        $region113: #{tpu_custom_call.1} parent=87 // pred_check
          %p1703 = pneg %p450
        $region114: #{tpu_custom_call.1} parent=87 // pred_check_branch
          %1705 = sbr.rel (%p1703) target = $region116
        $region115: #{tpu_custom_call.1} parent=87 // pred_region
          %s1706 = smul.u32 2, %s42
          %s1708 = ssub.s32 256, 256
          %1709 = vsyncadd %s1699, %s1708
          %s1710 = smul.addr %s41, 2
          %s1711 = sadd.s32 %s1706, %s1710
          %s1712 = smul.addr %s1711, 128
          %s1713 = scalar_lea.hbm %s17, %s1712
          %s1714 = sshll.u32 %s1702, 4
          %s1715 = int_to_ptr.vmem [resolvable:$true] %s1714
          %1720 = dma.vmem_to_hbm [thread:$0]  %s1715, 256, %s1713, %s1699, 128, 128, 8
        $region116: #{tpu_custom_call.1} parent=87 // pred_fallthru
          _
      $region88: #{tpu_custom_call.1} parent=5 // pred_fallthru
        _
      %p1721 = scmp.le.s32.totalorder 2, %s32
      // Predicated region
      $region117: #{tpu_custom_call.1} parent=5 // pred_check
        %p1722 = pneg %p1721
      $region118: #{tpu_custom_call.1} parent=5 // pred_check_branch
        %1724 = sbr.rel (%p1722) target = $region120
      $region119: #{tpu_custom_call.1} parent=5 // pred_region
        %s1725 = ssub.s32 %s32, 2
        // Predicated region
        $region121: #{tpu_custom_call.1} parent=119 // pred_check
          %p1726 = pneg %p456
        $region122: #{tpu_custom_call.1} parent=119 // pred_check_branch
          %1728 = sbr.rel (%p1726) target = $region124
        $region123: #{tpu_custom_call.1} parent=119 // pred_region
          %s1729 = sand.u32 %s441, 1
          %s1730 = scalar_lea.sflag [#allocation4], %s1729
          %s1731 = sand.u32 %s441, 1
          %s1732 = smul.addr %s1731, 16
          %s1733 = scalar_lea.vmem [#allocation13], %s1732
          %1734 = dma.done %s1730, 256
        $region124: #{tpu_custom_call.1} parent=119 // pred_fallthru
          _
      $region120: #{tpu_custom_call.1} parent=5 // pred_fallthru
        _
    $region6: #{tpu_custom_call.1} parent=1 // loop_footer
      %s36 = sadd.s32 1, %s32
    $region7: #{tpu_custom_call.1} parent=1 // loop_footer_branch
      %31 = sbr.rel target = $region3
    $region8: #{tpu_custom_call.1} parent=1 // loop_exit
      _
    %1735 = vsyncpa [#allocation3], 1
    %s1736 = scalar_lea.sflag [#allocation3], 1
    %1737 = vsyncpa %s1736, 1
    %1738 = vsyncpa [#allocation6], 1
    %1739 = vsyncpa [#allocation9], 1
    %1740 = vsyncpa [#allocation12], 1
    %1741 = vsyncpa [#allocation4], 1
    %s1742 = scalar_lea.sflag [#allocation4], 1
    %1743 = vsyncpa %s1742, 1

</llo_original>
